<compile_context>
chip_gen: v7x
topology: tpu7x:2x2x1
jax: 0.10.0
libtpu: 0.0.40
codegen_flags: <defaults>
</compile_context>

<pallas_src>
import functools

import jax
import jax.numpy as jnp
from jax import lax
from jax.experimental import pallas as pl
from jax.experimental.pallas import tpu as pltpu


def _default_vmem_limit():
    """~half of physical VMEM: 64 MiB on v5e/v6e (128 MiB), 32 MiB on v7x."""
    try:
        info = pltpu.get_tpu_info()
        cap = int(getattr(info, "vmem_capacity_bytes", 0) or 0)
        if cap > 0:
            return int(max(32 * 1024 * 1024, min(96 * 1024 * 1024, cap // 2)))
    except Exception:
        pass
    return 32 * 1024 * 1024


_VMEM_LIMIT = _default_vmem_limit()

# Max elements per f32 accumulator plane (Tb * M_pad).  Two planes at this
# size use 64 KiB of the 256 KiB vreg file, leaving headroom for the per-
# iteration xr/xi loads -> no spills.
_ACC_BUDGET = 8192


# ---------------------------------------------------------------------------
# Kernel 1: complex channel mixing of retained Fourier modes.
#   out[o, b, m] = sum_i  x[i, b, m] * w[o, i, m]    (complex, per lane m)
# Lane-dense blocks (both low/high mode windows already folded onto M):
#   x  (real/imag) : (Cin, B_pad, M_pad)      -> block (Cin, Tb, M_pad)
#   w  (real/imag) : (Cout_pad, Cin, M_pad)   -> block (To, Cin, M_pad)
#   out(real/imag) : (Cout_pad, B_pad, M_pad) -> block (To, Tb, M_pad)
# Grid = (Cout tiles, B tiles); Cin reduced in-kernel with a partially
# unrolled fori_loop; plain 4-mul complex MAC.
# ---------------------------------------------------------------------------
def _spectral_mix_kernel(xr_ref, xi_ref, wr_ref, wi_ref, or_ref, oi_ref):
    Cin = xr_ref.shape[0]
    To, Tb, M = or_ref.shape
    unroll = Cin if Cin <= 8 else 8

    for o in range(To):                      # static (unrolled) loop over Cout tile
        wr_o = wr_ref.at[o]                  # (Cin, M) ref view, zero cost
        wi_o = wi_ref.at[o]

        def body(i, carry, wr_o=wr_o, wi_o=wi_o):
            acc_re, acc_im = carry
            xr = xr_ref[i]                   # (Tb, M)
            xi = xi_ref[i]                   # (Tb, M)
            wr = wr_o[pl.ds(i, 1), :]        # (1, M) -> broadcast over Tb
            wi = wi_o[pl.ds(i, 1), :]        # (1, M)
            acc_re = acc_re + (xr * wr - xi * wi)
            acc_im = acc_im + (xr * wi + xi * wr)
            return acc_re, acc_im

        acc_re = jnp.zeros((Tb, M), jnp.float32)
        acc_im = jnp.zeros((Tb, M), jnp.float32)
        acc_re, acc_im = lax.fori_loop(0, Cin, body, (acc_re, acc_im),
                                       unroll=unroll)
        or_ref[o] = acc_re
        oi_ref[o] = acc_im


def spectral_mix(x_low, x_high, w1, w2):
    """x_low / x_high: (B, Cin, m1, m2) complex64 mode windows.
    w1 / w2:          (Cin, Cout, m1, m2) complex64 weights.
    Returns (low, high): each (B, Cout, m1, m2) complex64."""
    B, Cin, m1, m2 = x_low.shape
    Cout = w1.shape[1]

    # Fold the low/high (S) axis onto the lane axis: one combined M dimension.
    M = 2 * m1 * m2
    M_pad = max(128, ((M + 127) // 128) * 128)

    x_comb = jnp.concatenate([x_low, x_high], axis=2)          # (B, Cin, 2m1, m2)
    x_flat = jnp.transpose(x_comb.reshape(B, Cin, M), (1, 0, 2))   # (Cin, B, M)
    w_comb = jnp.concatenate([w1, w2], axis=2)                 # (Cin, Cout, 2m1, m2)
    w_flat = jnp.transpose(w_comb.reshape(Cin, Cout, M), (1, 0, 2))  # (Cout, Cin, M)

    xr = jnp.real(x_flat).astype(jnp.float32)
    xi = jnp.imag(x_flat).astype(jnp.float32)
    wr = jnp.real(w_flat).astype(jnp.float32)
    wi = jnp.imag(w_flat).astype(jnp.float32)

    # --- tiling decisions ---
    To = min(Cout, 8)                         # output channels per grid step
    n_co = pl.cdiv(Cout, To)
    Cout_pad = n_co * To

    if B * M_pad <= _ACC_BUDGET or B < 8:
        Tb = B                                # full batch per step (small case)
    else:
        Tb = max(8, min((B // 8) * 8, ((_ACC_BUDGET // M_pad) // 8) * 8))
    n_b = pl.cdiv(B, Tb)
    B_pad = n_b * Tb

    pad_m = M_pad - M
    pad_b = B_pad - B
    pad_co = Cout_pad - Cout
    if pad_m or pad_b:
        xr = jnp.pad(xr, ((0, 0), (0, pad_b), (0, pad_m)))
        xi = jnp.pad(xi, ((0, 0), (0, pad_b), (0, pad_m)))
    if pad_m or pad_co:
        wr = jnp.pad(wr, ((0, pad_co), (0, 0), (0, pad_m)))
        wi = jnp.pad(wi, ((0, pad_co), (0, 0), (0, pad_m)))

    x_spec = pl.BlockSpec((Cin, Tb, M_pad), lambda co, b: (0, b, 0))
    w_spec = pl.BlockSpec((To, Cin, M_pad), lambda co, b: (co, 0, 0))
    o_spec = pl.BlockSpec((To, Tb, M_pad), lambda co, b: (co, b, 0))

    out_re, out_im = pl.pallas_call(
        _spectral_mix_kernel,
        out_shape=(
            jax.ShapeDtypeStruct((Cout_pad, B_pad, M_pad), jnp.float32),
            jax.ShapeDtypeStruct((Cout_pad, B_pad, M_pad), jnp.float32),
        ),
        grid=(n_co, n_b),
        in_specs=[x_spec, x_spec, w_spec, w_spec],
        out_specs=(o_spec, o_spec),
        compiler_params=pltpu.CompilerParams(
            dimension_semantics=("parallel", "parallel"),
            vmem_limit_bytes=_VMEM_LIMIT,
        ),
    )(xr, xi, wr, wi)

    out = (out_re[:Cout, :B, :M] + 1j * out_im[:Cout, :B, :M]).astype(jnp.complex64)
    # (Cout, B, M) -> (B, Cout, 2*m1, m2)   (tiny arrays, cheap transpose)
    out = jnp.transpose(out, (1, 0, 2)).reshape(B, Cout, 2 * m1, m2)
    return out[:, :, :m1, :], out[:, :, m1:, :]


# ---------------------------------------------------------------------------
# Kernel 2: 1x1 conv (channel matmul) + bias + residual add of spectral branch.
#   out[b, :, n] = W0 @ x[b, :, n] + b0 + x1[b, :, n]
# Native (B, C, H*W) layout -- no wrapper transposes.  Grid = (HW tiles, B),
# the H*W axis is lane-dense; the tile is chosen to divide HW when possible so
# no wrapper-side padding copies are materialized (kernel is HBM-bound).
# ---------------------------------------------------------------------------
def _conv1x1_add_kernel(w_ref, b_ref, x_ref, x1_ref, o_ref):
    o_ref[...] = (
        jnp.dot(w_ref[...], x_ref[...], preferred_element_type=jnp.float32)
        + b_ref[...]
        + x1_ref[...]
    )


def conv1x1_add(x_nchw, x1_nchw, w0, b0, *, tile_n_max=2048):
    """x_nchw: (B, Cin, H, W), x1_nchw: (B, Cout, H, W),
    w0: (Cout, Cin), b0: (Cout,) -> (B, Cout, H, W)"""
    B, Cin, H, W = x_nchw.shape
    Cout = w0.shape[0]
    HW = H * W

    # Pick the largest multiple-of-128 tile <= tile_n_max that divides HW
    # (common power-of-two grids need no padding); otherwise fall back to pad.
    tile_n = None
    if HW % 128 == 0:
        t = min(tile_n_max, HW)
        t -= t % 128
        while t >= 128:
            if HW % t == 0:
                tile_n = t
                break
            t -= 128
    if tile_n is None:
        tile_n = min(tile_n_max, ((HW + 127) // 128) * 128)
    n_tiles = pl.cdiv(HW, tile_n)
    HW_pad = n_tiles * tile_n

    x = x_nchw.reshape(B, Cin, HW).astype(jnp.float32)
    x1 = x1_nchw.reshape(B, Cout, HW).astype(jnp.float32)
    if HW_pad != HW:
        x = jnp.pad(x, ((0, 0), (0, 0), (0, HW_pad - HW)))
        x1 = jnp.pad(x1, ((0, 0), (0, 0), (0, HW_pad - HW)))

    out = pl.pallas_call(
        _conv1x1_add_kernel,
        out_shape=jax.ShapeDtypeStruct((B, Cout, HW_pad), jnp.float32),
        grid=(n_tiles, B),
        in_specs=[
            pl.BlockSpec((Cout, Cin), lambda j, b: (0, 0)),
            pl.BlockSpec((Cout, 1), lambda j, b: (0, 0)),
            pl.BlockSpec((pl.Squeezed(), Cin, tile_n), lambda j, b: (b, 0, j)),
            pl.BlockSpec((pl.Squeezed(), Cout, tile_n), lambda j, b: (b, 0, j)),
        ],
        out_specs=pl.BlockSpec((pl.Squeezed(), Cout, tile_n),
                               lambda j, b: (b, 0, j)),
        compiler_params=pltpu.CompilerParams(
            dimension_semantics=("parallel", "parallel"),
            vmem_limit_bytes=_VMEM_LIMIT,
        ),
    )(w0.astype(jnp.float32), b0.reshape(Cout, 1).astype(jnp.float32), x, x1)

    if HW_pad != HW:
        out = out[:, :, :HW]
    return out.reshape(B, Cout, H, W)


# ---------------------------------------------------------------------------
# FNO2d forward
# ---------------------------------------------------------------------------
@functools.partial(jax.jit, static_argnames=("modes1", "modes2"))
def fno2d_forward(x, weights1, weights2, w0, b0, *, modes1, modes2):
    """x: (B, Cin, H, W) float32 (NCHW)."""
    B, Cin, H, W = x.shape
    Cout = w0.shape[0]

    # --- SpectralConv2d_fast branch ---
    x_ft = jnp.fft.rfft2(x)                                  # (B, Cin, H, W//2+1)
    mixed_low, mixed_high = spectral_mix(
        x_ft[:, :, :modes1, :modes2],
        x_ft[:, :, H - modes1:, :modes2],
        weights1, weights2)                                  # (B, Cout, m1, m2) x2

    out_ft = jnp.zeros((B, Cout, H, W // 2 + 1), jnp.complex64)
    out_ft = out_ft.at[:, :, :modes1, :modes2].set(mixed_low)
    out_ft = out_ft.at[:, :, H - modes1:, :modes2].set(mixed_high)
    x1 = jnp.fft.irfft2(out_ft, s=(H, W)).astype(jnp.float32)  # (B, Cout, H, W)

    # --- 1x1 conv branch + bias + residual add (fused Pallas kernel) ---
    return conv1x1_add(x, x1, w0, b0)


# ---------------------------------------------------------------------------
# Pure-JAX reference for verification
# ---------------------------------------------------------------------------
def fno2d_reference(x, weights1, weights2, w0, b0, *, modes1, modes2):
    B, Cin, H, W = x.shape
    Cout = w0.shape[0]
    x_ft = jnp.fft.rfft2(x)
    cmul = lambda inp, w: jnp.einsum("bixy,ioxy->boxy", inp, w)
    out_ft = jnp.zeros((B, Cout, H, W // 2 + 1), jnp.complex64)
    out_ft = out_ft.at[:, :, :modes1, :modes2].set(
        cmul(x_ft[:, :, :modes1, :modes2], weights1))
    out_ft = out_ft.at[:, :, H - modes1:, :modes2].set(
        cmul(x_ft[:, :, -modes1:, :modes2], weights2))
    x1 = jnp.fft.irfft2(out_ft, s=(H, W))
    x2 = jnp.einsum("oi,bihw->bohw", w0, x) + b0[None, :, None, None]
    return x1 + x2


if __name__ == "__main__":
    B, Cin, Cout = 2, 4, 4
    H = W = 16
    modes1 = modes2 = 4

    key = jax.random.PRNGKey(0)
    k1, k2, k3, k4, k5, k6, kx = jax.random.split(key, 7)

    scale = 1.0 / (Cin * Cout)
    weights1 = scale * (
        jax.random.uniform(k1, (Cin, Cout, modes1, modes2), jnp.float32)
        + 1j * jax.random.uniform(k2, (Cin, Cout, modes1, modes2), jnp.float32)
    ).astype(jnp.complex64)
    weights2 = scale * (
        jax.random.uniform(k3, (Cin, Cout, modes1, modes2), jnp.float32)
        + 1j * jax.random.uniform(k4, (Cin, Cout, modes1, modes2), jnp.float32)
    ).astype(jnp.complex64)

    # 1x1 Conv2d parameters: weight (Cout, Cin, 1, 1) -> stored as (Cout, Cin)
    bound = 1.0 / (Cin ** 0.5)
    w0 = jax.random.uniform(k5, (Cout, Cin), jnp.float32, -bound, bound)
    b0 = jax.random.uniform(k6, (Cout,), jnp.float32, -bound, bound)

    x = jax.random.normal(kx, (B, Cin, H, W), jnp.float32)

    out = fno2d_forward(x, weights1, weights2, w0, b0,
                        modes1=modes1, modes2=modes2)
    out = jax.block_until_ready(out)

    ref = fno2d_reference(x, weights1, weights2, w0, b0,
                          modes1=modes1, modes2=modes2)
    assert out.shape == (B, Cout, H, W)
    assert jnp.allclose(out, ref, atol=1e-4, rtol=1e-4), "mismatch vs reference"

    print("KERNEL_OK")
</pallas_src>

<mosaic_0001>
module attributes {stable_mosaic.version = 11 : i64} {
  func.func @_spectral_mix_kernel(%arg0: i32, %arg1: i32, %arg2: memref<4x2x128xf32, #tpu.memory_space<vmem>>, %arg3: memref<4x2x128xf32, #tpu.memory_space<vmem>>, %arg4: memref<4x4x128xf32, #tpu.memory_space<vmem>>, %arg5: memref<4x4x128xf32, #tpu.memory_space<vmem>>, %arg6: memref<4x2x128xf32, #tpu.memory_space<vmem>>, %arg7: memref<4x2x128xf32, #tpu.memory_space<vmem>>) attributes {dimension_semantics = [#tpu.dimension_semantics<parallel>, #tpu.dimension_semantics<parallel>], iteration_bounds = array<i64: 1, 1>, scalar_prefetch = 0 : i64, scratch_operands = 0 : i64, tpu.core_type = #tpu.core_type<tc>, window_params = [{transform_indices = @transform_0, window_bounds = array<i64: 4, 2, 128>}, {transform_indices = @transform_1, window_bounds = array<i64: 4, 2, 128>}, {transform_indices = @transform_2, window_bounds = array<i64: 4, 4, 128>}, {transform_indices = @transform_3, window_bounds = array<i64: 4, 4, 128>}, {transform_indices = @transform_4, window_bounds = array<i64: 4, 2, 128>}, {transform_indices = @transform_5, window_bounds = array<i64: 4, 2, 128>}]} {
    %cst = arith.constant 0.000000e+00 : f32
    %0 = vector.broadcast %cst : f32 to vector<2x128xf32>
    %cst_0 = arith.constant 0.000000e+00 : f32
    %1 = vector.broadcast %cst_0 : f32 to vector<2x128xf32>
    %c0_i32 = arith.constant 0 : i32
    %c0_i32_1 = arith.constant 0 : i32
    %c0_i32_2 = arith.constant 0 : i32
    %2 = arith.index_cast %c0_i32_2 : i32 to index
    %c0 = arith.constant 0 : index
    %c0_3 = arith.constant 0 : index
    %3 = vector.load %arg2[%2, %c0, %c0_3] : memref<4x2x128xf32, #tpu.memory_space<vmem>>, vector<1x2x128xf32>
    %4 = vector.shape_cast %3 : vector<1x2x128xf32> to vector<2x128xf32>
    %5 = arith.index_cast %c0_i32_2 : i32 to index
    %c0_4 = arith.constant 0 : index
    %c0_5 = arith.constant 0 : index
    %6 = vector.load %arg3[%5, %c0_4, %c0_5] : memref<4x2x128xf32, #tpu.memory_space<vmem>>, vector<1x2x128xf32>
    %7 = vector.shape_cast %6 : vector<1x2x128xf32> to vector<2x128xf32>
    %c0_i32_6 = arith.constant 0 : i32
    %c0_i32_7 = arith.constant 0 : i32
    %8 = tpu.memref_slice %arg4[%c0_i32, %c0_i32_6, %c0_i32_7] : memref<4x4x128xf32, #tpu.memory_space<vmem>> -> memref<1x4x128xf32, #tpu.memory_space<vmem>>
    %9 = tpu.memref_squeeze %8 : memref<1x4x128xf32, #tpu.memory_space<vmem>> -> memref<4x128xf32, #tpu.memory_space<vmem>>
    %10 = arith.index_cast %c0_i32_2 : i32 to index
    %c0_8 = arith.constant 0 : index
    %11 = vector.load %9[%10, %c0_8] : memref<4x128xf32, #tpu.memory_space<vmem>>, vector<1x128xf32>
    %c0_i32_9 = arith.constant 0 : i32
    %c0_i32_10 = arith.constant 0 : i32
    %12 = tpu.memref_slice %arg5[%c0_i32_1, %c0_i32_9, %c0_i32_10] : memref<4x4x128xf32, #tpu.memory_space<vmem>> -> memref<1x4x128xf32, #tpu.memory_space<vmem>>
    %13 = tpu.memref_squeeze %12 : memref<1x4x128xf32, #tpu.memory_space<vmem>> -> memref<4x128xf32, #tpu.memory_space<vmem>>
    %14 = arith.index_cast %c0_i32_2 : i32 to index
    %c0_11 = arith.constant 0 : index
    %15 = vector.load %13[%14, %c0_11] : memref<4x128xf32, #tpu.memory_space<vmem>>, vector<1x128xf32>
    %16 = vector.broadcast %11 : vector<1x128xf32> to vector<2x128xf32>
    %17 = arith.mulf %4, %16 : vector<2x128xf32>
    %18 = vector.broadcast %15 : vector<1x128xf32> to vector<2x128xf32>
    %19 = arith.mulf %7, %18 : vector<2x128xf32>
    %20 = arith.subf %17, %19 : vector<2x128xf32>
    %21 = arith.addf %0, %20 : vector<2x128xf32>
    %22 = vector.broadcast %15 : vector<1x128xf32> to vector<2x128xf32>
    %23 = arith.mulf %4, %22 : vector<2x128xf32>
    %24 = vector.broadcast %11 : vector<1x128xf32> to vector<2x128xf32>
    %25 = arith.mulf %7, %24 : vector<2x128xf32>
    %26 = arith.addf %23, %25 : vector<2x128xf32>
    %27 = arith.addf %1, %26 : vector<2x128xf32>
    %c1_i32 = arith.constant 1 : i32
    %28 = arith.index_cast %c1_i32 : i32 to index
    %c0_12 = arith.constant 0 : index
    %c0_13 = arith.constant 0 : index
    %29 = vector.load %arg2[%28, %c0_12, %c0_13] : memref<4x2x128xf32, #tpu.memory_space<vmem>>, vector<1x2x128xf32>
    %30 = vector.shape_cast %29 : vector<1x2x128xf32> to vector<2x128xf32>
    %31 = arith.index_cast %c1_i32 : i32 to index
    %c0_14 = arith.constant 0 : index
    %c0_15 = arith.constant 0 : index
    %32 = vector.load %arg3[%31, %c0_14, %c0_15] : memref<4x2x128xf32, #tpu.memory_space<vmem>>, vector<1x2x128xf32>
    %33 = vector.shape_cast %32 : vector<1x2x128xf32> to vector<2x128xf32>
    %c0_i32_16 = arith.constant 0 : i32
    %c0_i32_17 = arith.constant 0 : i32
    %34 = tpu.memref_slice %arg4[%c0_i32, %c0_i32_16, %c0_i32_17] : memref<4x4x128xf32, #tpu.memory_space<vmem>> -> memref<1x4x128xf32, #tpu.memory_space<vmem>>
    %35 = tpu.memref_squeeze %34 : memref<1x4x128xf32, #tpu.memory_space<vmem>> -> memref<4x128xf32, #tpu.memory_space<vmem>>
    %36 = arith.index_cast %c1_i32 : i32 to index
    %c0_18 = arith.constant 0 : index
    %37 = vector.load %35[%36, %c0_18] : memref<4x128xf32, #tpu.memory_space<vmem>>, vector<1x128xf32>
    %c0_i32_19 = arith.constant 0 : i32
    %c0_i32_20 = arith.constant 0 : i32
    %38 = tpu.memref_slice %arg5[%c0_i32_1, %c0_i32_19, %c0_i32_20] : memref<4x4x128xf32, #tpu.memory_space<vmem>> -> memref<1x4x128xf32, #tpu.memory_space<vmem>>
    %39 = tpu.memref_squeeze %38 : memref<1x4x128xf32, #tpu.memory_space<vmem>> -> memref<4x128xf32, #tpu.memory_space<vmem>>
    %40 = arith.index_cast %c1_i32 : i32 to index
    %c0_21 = arith.constant 0 : index
    %41 = vector.load %39[%40, %c0_21] : memref<4x128xf32, #tpu.memory_space<vmem>>, vector<1x128xf32>
    %42 = vector.broadcast %37 : vector<1x128xf32> to vector<2x128xf32>
    %43 = arith.mulf %30, %42 : vector<2x128xf32>
    %44 = vector.broadcast %41 : vector<1x128xf32> to vector<2x128xf32>
    %45 = arith.mulf %33, %44 : vector<2x128xf32>
    %46 = arith.subf %43, %45 : vector<2x128xf32>
    %47 = arith.addf %21, %46 : vector<2x128xf32>
    %48 = vector.broadcast %41 : vector<1x128xf32> to vector<2x128xf32>
    %49 = arith.mulf %30, %48 : vector<2x128xf32>
    %50 = vector.broadcast %37 : vector<1x128xf32> to vector<2x128xf32>
    %51 = arith.mulf %33, %50 : vector<2x128xf32>
    %52 = arith.addf %49, %51 : vector<2x128xf32>
    %53 = arith.addf %27, %52 : vector<2x128xf32>
    %c2_i32 = arith.constant 2 : i32
    %54 = arith.index_cast %c2_i32 : i32 to index
    %c0_22 = arith.constant 0 : index
    %c0_23 = arith.constant 0 : index
    %55 = vector.load %arg2[%54, %c0_22, %c0_23] : memref<4x2x128xf32, #tpu.memory_space<vmem>>, vector<1x2x128xf32>
    %56 = vector.shape_cast %55 : vector<1x2x128xf32> to vector<2x128xf32>
    %57 = arith.index_cast %c2_i32 : i32 to index
    %c0_24 = arith.constant 0 : index
    %c0_25 = arith.constant 0 : index
    %58 = vector.load %arg3[%57, %c0_24, %c0_25] : memref<4x2x128xf32, #tpu.memory_space<vmem>>, vector<1x2x128xf32>
    %59 = vector.shape_cast %58 : vector<1x2x128xf32> to vector<2x128xf32>
    %c0_i32_26 = arith.constant 0 : i32
    %c0_i32_27 = arith.constant 0 : i32
    %60 = tpu.memref_slice %arg4[%c0_i32, %c0_i32_26, %c0_i32_27] : memref<4x4x128xf32, #tpu.memory_space<vmem>> -> memref<1x4x128xf32, #tpu.memory_space<vmem>>
    %61 = tpu.memref_squeeze %60 : memref<1x4x128xf32, #tpu.memory_space<vmem>> -> memref<4x128xf32, #tpu.memory_space<vmem>>
    %62 = arith.index_cast %c2_i32 : i32 to index
    %c0_28 = arith.constant 0 : index
    %63 = vector.load %61[%62, %c0_28] : memref<4x128xf32, #tpu.memory_space<vmem>>, vector<1x128xf32>
    %c0_i32_29 = arith.constant 0 : i32
    %c0_i32_30 = arith.constant 0 : i32
    %64 = tpu.memref_slice %arg5[%c0_i32_1, %c0_i32_29, %c0_i32_30] : memref<4x4x128xf32, #tpu.memory_space<vmem>> -> memref<1x4x128xf32, #tpu.memory_space<vmem>>
    %65 = tpu.memref_squeeze %64 : memref<1x4x128xf32, #tpu.memory_space<vmem>> -> memref<4x128xf32, #tpu.memory_space<vmem>>
    %66 = arith.index_cast %c2_i32 : i32 to index
    %c0_31 = arith.constant 0 : index
    %67 = vector.load %65[%66, %c0_31] : memref<4x128xf32, #tpu.memory_space<vmem>>, vector<1x128xf32>
    %68 = vector.broadcast %63 : vector<1x128xf32> to vector<2x128xf32>
    %69 = arith.mulf %56, %68 : vector<2x128xf32>
    %70 = vector.broadcast %67 : vector<1x128xf32> to vector<2x128xf32>
    %71 = arith.mulf %59, %70 : vector<2x128xf32>
    %72 = arith.subf %69, %71 : vector<2x128xf32>
    %73 = arith.addf %47, %72 : vector<2x128xf32>
    %74 = vector.broadcast %67 : vector<1x128xf32> to vector<2x128xf32>
    %75 = arith.mulf %56, %74 : vector<2x128xf32>
    %76 = vector.broadcast %63 : vector<1x128xf32> to vector<2x128xf32>
    %77 = arith.mulf %59, %76 : vector<2x128xf32>
    %78 = arith.addf %75, %77 : vector<2x128xf32>
    %79 = arith.addf %53, %78 : vector<2x128xf32>
    %c3_i32 = arith.constant 3 : i32
    %80 = arith.index_cast %c3_i32 : i32 to index
    %c0_32 = arith.constant 0 : index
    %c0_33 = arith.constant 0 : index
    %81 = vector.load %arg2[%80, %c0_32, %c0_33] : memref<4x2x128xf32, #tpu.memory_space<vmem>>, vector<1x2x128xf32>
    %82 = vector.shape_cast %81 : vector<1x2x128xf32> to vector<2x128xf32>
    %83 = arith.index_cast %c3_i32 : i32 to index
    %c0_34 = arith.constant 0 : index
    %c0_35 = arith.constant 0 : index
    %84 = vector.load %arg3[%83, %c0_34, %c0_35] : memref<4x2x128xf32, #tpu.memory_space<vmem>>, vector<1x2x128xf32>
    %85 = vector.shape_cast %84 : vector<1x2x128xf32> to vector<2x128xf32>
    %c0_i32_36 = arith.constant 0 : i32
    %c0_i32_37 = arith.constant 0 : i32
    %86 = tpu.memref_slice %arg4[%c0_i32, %c0_i32_36, %c0_i32_37] : memref<4x4x128xf32, #tpu.memory_space<vmem>> -> memref<1x4x128xf32, #tpu.memory_space<vmem>>
    %87 = tpu.memref_squeeze %86 : memref<1x4x128xf32, #tpu.memory_space<vmem>> -> memref<4x128xf32, #tpu.memory_space<vmem>>
    %88 = arith.index_cast %c3_i32 : i32 to index
    %c0_38 = arith.constant 0 : index
    %89 = vector.load %87[%88, %c0_38] : memref<4x128xf32, #tpu.memory_space<vmem>>, vector<1x128xf32>
    %c0_i32_39 = arith.constant 0 : i32
    %c0_i32_40 = arith.constant 0 : i32
    %90 = tpu.memref_slice %arg5[%c0_i32_1, %c0_i32_39, %c0_i32_40] : memref<4x4x128xf32, #tpu.memory_space<vmem>> -> memref<1x4x128xf32, #tpu.memory_space<vmem>>
    %91 = tpu.memref_squeeze %90 : memref<1x4x128xf32, #tpu.memory_space<vmem>> -> memref<4x128xf32, #tpu.memory_space<vmem>>
    %92 = arith.index_cast %c3_i32 : i32 to index
    %c0_41 = arith.constant 0 : index
    %93 = vector.load %91[%92, %c0_41] : memref<4x128xf32, #tpu.memory_space<vmem>>, vector<1x128xf32>
    %94 = vector.broadcast %89 : vector<1x128xf32> to vector<2x128xf32>
    %95 = arith.mulf %82, %94 : vector<2x128xf32>
    %96 = vector.broadcast %93 : vector<1x128xf32> to vector<2x128xf32>
    %97 = arith.mulf %85, %96 : vector<2x128xf32>
    %98 = arith.subf %95, %97 : vector<2x128xf32>
    %99 = arith.addf %73, %98 : vector<2x128xf32>
    %100 = vector.broadcast %93 : vector<1x128xf32> to vector<2x128xf32>
    %101 = arith.mulf %82, %100 : vector<2x128xf32>
    %102 = vector.broadcast %89 : vector<1x128xf32> to vector<2x128xf32>
    %103 = arith.mulf %85, %102 : vector<2x128xf32>
    %104 = arith.addf %101, %103 : vector<2x128xf32>
    %105 = arith.addf %79, %104 : vector<2x128xf32>
    %c4_i32 = arith.constant 4 : i32
    %c0_42 = arith.constant 0 : index
    %c0_43 = arith.constant 0 : index
    %c0_44 = arith.constant 0 : index
    %106 = vector.load %arg6[%c0_42, %c0_43, %c0_44] : memref<4x2x128xf32, #tpu.memory_space<vmem>>, vector<1x2x128xf32>
    %107 = vector.shape_cast %106 : vector<1x2x128xf32> to vector<2x128xf32>
    %108 = vector.shape_cast %99 : vector<2x128xf32> to vector<1x2x128xf32>
    tpu.vector_store %arg6[%c0_42, %c0_43, %c0_44], %108 {strides = array<i32>} : memref<4x2x128xf32, #tpu.memory_space<vmem>>, vector<1x2x128xf32>,
    %c0_45 = arith.constant 0 : index
    %c0_46 = arith.constant 0 : index
    %c0_47 = arith.constant 0 : index
    %109 = vector.load %arg7[%c0_45, %c0_46, %c0_47] : memref<4x2x128xf32, #tpu.memory_space<vmem>>, vector<1x2x128xf32>
    %110 = vector.shape_cast %109 : vector<1x2x128xf32> to vector<2x128xf32>
    %111 = vector.shape_cast %105 : vector<2x128xf32> to vector<1x2x128xf32>
    tpu.vector_store %arg7[%c0_45, %c0_46, %c0_47], %111 {strides = array<i32>} : memref<4x2x128xf32, #tpu.memory_space<vmem>>, vector<1x2x128xf32>,
    %cst_48 = arith.constant 0.000000e+00 : f32
    %112 = vector.broadcast %cst_48 : f32 to vector<2x128xf32>
    %cst_49 = arith.constant 0.000000e+00 : f32
    %113 = vector.broadcast %cst_49 : f32 to vector<2x128xf32>
    %c1_i32_50 = arith.constant 1 : i32
    %c1_i32_51 = arith.constant 1 : i32
    %c0_i32_52 = arith.constant 0 : i32
    %114 = arith.index_cast %c0_i32_52 : i32 to index
    %c0_53 = arith.constant 0 : index
    %c0_54 = arith.constant 0 : index
    %115 = vector.load %arg2[%114, %c0_53, %c0_54] : memref<4x2x128xf32, #tpu.memory_space<vmem>>, vector<1x2x128xf32>
    %116 = vector.shape_cast %115 : vector<1x2x128xf32> to vector<2x128xf32>
    %117 = arith.index_cast %c0_i32_52 : i32 to index
    %c0_55 = arith.constant 0 : index
    %c0_56 = arith.constant 0 : index
    %118 = vector.load %arg3[%117, %c0_55, %c0_56] : memref<4x2x128xf32, #tpu.memory_space<vmem>>, vector<1x2x128xf32>
    %119 = vector.shape_cast %118 : vector<1x2x128xf32> to vector<2x128xf32>
    %c0_i32_57 = arith.constant 0 : i32
    %c0_i32_58 = arith.constant 0 : i32
    %120 = tpu.memref_slice %arg4[%c1_i32_50, %c0_i32_57, %c0_i32_58] : memref<4x4x128xf32, #tpu.memory_space<vmem>> -> memref<1x4x128xf32, #tpu.memory_space<vmem>>
    %121 = tpu.memref_squeeze %120 : memref<1x4x128xf32, #tpu.memory_space<vmem>> -> memref<4x128xf32, #tpu.memory_space<vmem>>
    %122 = arith.index_cast %c0_i32_52 : i32 to index
    %c0_59 = arith.constant 0 : index
    %123 = vector.load %121[%122, %c0_59] : memref<4x128xf32, #tpu.memory_space<vmem>>, vector<1x128xf32>
    %c0_i32_60 = arith.constant 0 : i32
    %c0_i32_61 = arith.constant 0 : i32
    %124 = tpu.memref_slice %arg5[%c1_i32_51, %c0_i32_60, %c0_i32_61] : memref<4x4x128xf32, #tpu.memory_space<vmem>> -> memref<1x4x128xf32, #tpu.memory_space<vmem>>
    %125 = tpu.memref_squeeze %124 : memref<1x4x128xf32, #tpu.memory_space<vmem>> -> memref<4x128xf32, #tpu.memory_space<vmem>>
    %126 = arith.index_cast %c0_i32_52 : i32 to index
    %c0_62 = arith.constant 0 : index
    %127 = vector.load %125[%126, %c0_62] : memref<4x128xf32, #tpu.memory_space<vmem>>, vector<1x128xf32>
    %128 = vector.broadcast %123 : vector<1x128xf32> to vector<2x128xf32>
    %129 = arith.mulf %116, %128 : vector<2x128xf32>
    %130 = vector.broadcast %127 : vector<1x128xf32> to vector<2x128xf32>
    %131 = arith.mulf %119, %130 : vector<2x128xf32>
    %132 = arith.subf %129, %131 : vector<2x128xf32>
    %133 = arith.addf %112, %132 : vector<2x128xf32>
    %134 = vector.broadcast %127 : vector<1x128xf32> to vector<2x128xf32>
    %135 = arith.mulf %116, %134 : vector<2x128xf32>
    %136 = vector.broadcast %123 : vector<1x128xf32> to vector<2x128xf32>
    %137 = arith.mulf %119, %136 : vector<2x128xf32>
    %138 = arith.addf %135, %137 : vector<2x128xf32>
    %139 = arith.addf %113, %138 : vector<2x128xf32>
    %c1_i32_63 = arith.constant 1 : i32
    %140 = arith.index_cast %c1_i32_63 : i32 to index
    %c0_64 = arith.constant 0 : index
    %c0_65 = arith.constant 0 : index
    %141 = vector.load %arg2[%140, %c0_64, %c0_65] : memref<4x2x128xf32, #tpu.memory_space<vmem>>, vector<1x2x128xf32>
    %142 = vector.shape_cast %141 : vector<1x2x128xf32> to vector<2x128xf32>
    %143 = arith.index_cast %c1_i32_63 : i32 to index
    %c0_66 = arith.constant 0 : index
    %c0_67 = arith.constant 0 : index
    %144 = vector.load %arg3[%143, %c0_66, %c0_67] : memref<4x2x128xf32, #tpu.memory_space<vmem>>, vector<1x2x128xf32>
    %145 = vector.shape_cast %144 : vector<1x2x128xf32> to vector<2x128xf32>
    %c0_i32_68 = arith.constant 0 : i32
    %c0_i32_69 = arith.constant 0 : i32
    %146 = tpu.memref_slice %arg4[%c1_i32_50, %c0_i32_68, %c0_i32_69] : memref<4x4x128xf32, #tpu.memory_space<vmem>> -> memref<1x4x128xf32, #tpu.memory_space<vmem>>
    %147 = tpu.memref_squeeze %146 : memref<1x4x128xf32, #tpu.memory_space<vmem>> -> memref<4x128xf32, #tpu.memory_space<vmem>>
    %148 = arith.index_cast %c1_i32_63 : i32 to index
    %c0_70 = arith.constant 0 : index
    %149 = vector.load %147[%148, %c0_70] : memref<4x128xf32, #tpu.memory_space<vmem>>, vector<1x128xf32>
    %c0_i32_71 = arith.constant 0 : i32
    %c0_i32_72 = arith.constant 0 : i32
    %150 = tpu.memref_slice %arg5[%c1_i32_51, %c0_i32_71, %c0_i32_72] : memref<4x4x128xf32, #tpu.memory_space<vmem>> -> memref<1x4x128xf32, #tpu.memory_space<vmem>>
    %151 = tpu.memref_squeeze %150 : memref<1x4x128xf32, #tpu.memory_space<vmem>> -> memref<4x128xf32, #tpu.memory_space<vmem>>
    %152 = arith.index_cast %c1_i32_63 : i32 to index
    %c0_73 = arith.constant 0 : index
    %153 = vector.load %151[%152, %c0_73] : memref<4x128xf32, #tpu.memory_space<vmem>>, vector<1x128xf32>
    %154 = vector.broadcast %149 : vector<1x128xf32> to vector<2x128xf32>
    %155 = arith.mulf %142, %154 : vector<2x128xf32>
    %156 = vector.broadcast %153 : vector<1x128xf32> to vector<2x128xf32>
    %157 = arith.mulf %145, %156 : vector<2x128xf32>
    %158 = arith.subf %155, %157 : vector<2x128xf32>
    %159 = arith.addf %133, %158 : vector<2x128xf32>
    %160 = vector.broadcast %153 : vector<1x128xf32> to vector<2x128xf32>
    %161 = arith.mulf %142, %160 : vector<2x128xf32>
    %162 = vector.broadcast %149 : vector<1x128xf32> to vector<2x128xf32>
    %163 = arith.mulf %145, %162 : vector<2x128xf32>
    %164 = arith.addf %161, %163 : vector<2x128xf32>
    %165 = arith.addf %139, %164 : vector<2x128xf32>
    %c2_i32_74 = arith.constant 2 : i32
    %166 = arith.index_cast %c2_i32_74 : i32 to index
    %c0_75 = arith.constant 0 : index
    %c0_76 = arith.constant 0 : index
    %167 = vector.load %arg2[%166, %c0_75, %c0_76] : memref<4x2x128xf32, #tpu.memory_space<vmem>>, vector<1x2x128xf32>
    %168 = vector.shape_cast %167 : vector<1x2x128xf32> to vector<2x128xf32>
    %169 = arith.index_cast %c2_i32_74 : i32 to index
    %c0_77 = arith.constant 0 : index
    %c0_78 = arith.constant 0 : index
    %170 = vector.load %arg3[%169, %c0_77, %c0_78] : memref<4x2x128xf32, #tpu.memory_space<vmem>>, vector<1x2x128xf32>
    %171 = vector.shape_cast %170 : vector<1x2x128xf32> to vector<2x128xf32>
    %c0_i32_79 = arith.constant 0 : i32
    %c0_i32_80 = arith.constant 0 : i32
    %172 = tpu.memref_slice %arg4[%c1_i32_50, %c0_i32_79, %c0_i32_80] : memref<4x4x128xf32, #tpu.memory_space<vmem>> -> memref<1x4x128xf32, #tpu.memory_space<vmem>>
    %173 = tpu.memref_squeeze %172 : memref<1x4x128xf32, #tpu.memory_space<vmem>> -> memref<4x128xf32, #tpu.memory_space<vmem>>
    %174 = arith.index_cast %c2_i32_74 : i32 to index
    %c0_81 = arith.constant 0 : index
    %175 = vector.load %173[%174, %c0_81] : memref<4x128xf32, #tpu.memory_space<vmem>>, vector<1x128xf32>
    %c0_i32_82 = arith.constant 0 : i32
    %c0_i32_83 = arith.constant 0 : i32
    %176 = tpu.memref_slice %arg5[%c1_i32_51, %c0_i32_82, %c0_i32_83] : memref<4x4x128xf32, #tpu.memory_space<vmem>> -> memref<1x4x128xf32, #tpu.memory_space<vmem>>
    %177 = tpu.memref_squeeze %176 : memref<1x4x128xf32, #tpu.memory_space<vmem>> -> memref<4x128xf32, #tpu.memory_space<vmem>>
    %178 = arith.index_cast %c2_i32_74 : i32 to index
    %c0_84 = arith.constant 0 : index
    %179 = vector.load %177[%178, %c0_84] : memref<4x128xf32, #tpu.memory_space<vmem>>, vector<1x128xf32>
    %180 = vector.broadcast %175 : vector<1x128xf32> to vector<2x128xf32>
    %181 = arith.mulf %168, %180 : vector<2x128xf32>
    %182 = vector.broadcast %179 : vector<1x128xf32> to vector<2x128xf32>
    %183 = arith.mulf %171, %182 : vector<2x128xf32>
    %184 = arith.subf %181, %183 : vector<2x128xf32>
    %185 = arith.addf %159, %184 : vector<2x128xf32>
    %186 = vector.broadcast %179 : vector<1x128xf32> to vector<2x128xf32>
    %187 = arith.mulf %168, %186 : vector<2x128xf32>
    %188 = vector.broadcast %175 : vector<1x128xf32> to vector<2x128xf32>
    %189 = arith.mulf %171, %188 : vector<2x128xf32>
    %190 = arith.addf %187, %189 : vector<2x128xf32>
    %191 = arith.addf %165, %190 : vector<2x128xf32>
    %c3_i32_85 = arith.constant 3 : i32
    %192 = arith.index_cast %c3_i32_85 : i32 to index
    %c0_86 = arith.constant 0 : index
    %c0_87 = arith.constant 0 : index
    %193 = vector.load %arg2[%192, %c0_86, %c0_87] : memref<4x2x128xf32, #tpu.memory_space<vmem>>, vector<1x2x128xf32>
    %194 = vector.shape_cast %193 : vector<1x2x128xf32> to vector<2x128xf32>
    %195 = arith.index_cast %c3_i32_85 : i32 to index
    %c0_88 = arith.constant 0 : index
    %c0_89 = arith.constant 0 : index
    %196 = vector.load %arg3[%195, %c0_88, %c0_89] : memref<4x2x128xf32, #tpu.memory_space<vmem>>, vector<1x2x128xf32>
    %197 = vector.shape_cast %196 : vector<1x2x128xf32> to vector<2x128xf32>
    %c0_i32_90 = arith.constant 0 : i32
    %c0_i32_91 = arith.constant 0 : i32
    %198 = tpu.memref_slice %arg4[%c1_i32_50, %c0_i32_90, %c0_i32_91] : memref<4x4x128xf32, #tpu.memory_space<vmem>> -> memref<1x4x128xf32, #tpu.memory_space<vmem>>
    %199 = tpu.memref_squeeze %198 : memref<1x4x128xf32, #tpu.memory_space<vmem>> -> memref<4x128xf32, #tpu.memory_space<vmem>>
    %200 = arith.index_cast %c3_i32_85 : i32 to index
    %c0_92 = arith.constant 0 : index
    %201 = vector.load %199[%200, %c0_92] : memref<4x128xf32, #tpu.memory_space<vmem>>, vector<1x128xf32>
    %c0_i32_93 = arith.constant 0 : i32
    %c0_i32_94 = arith.constant 0 : i32
    %202 = tpu.memref_slice %arg5[%c1_i32_51, %c0_i32_93, %c0_i32_94] : memref<4x4x128xf32, #tpu.memory_space<vmem>> -> memref<1x4x128xf32, #tpu.memory_space<vmem>>
    %203 = tpu.memref_squeeze %202 : memref<1x4x128xf32, #tpu.memory_space<vmem>> -> memref<4x128xf32, #tpu.memory_space<vmem>>
    %204 = arith.index_cast %c3_i32_85 : i32 to index
    %c0_95 = arith.constant 0 : index
    %205 = vector.load %203[%204, %c0_95] : memref<4x128xf32, #tpu.memory_space<vmem>>, vector<1x128xf32>
    %206 = vector.broadcast %201 : vector<1x128xf32> to vector<2x128xf32>
    %207 = arith.mulf %194, %206 : vector<2x128xf32>
    %208 = vector.broadcast %205 : vector<1x128xf32> to vector<2x128xf32>
    %209 = arith.mulf %197, %208 : vector<2x128xf32>
    %210 = arith.subf %207, %209 : vector<2x128xf32>
    %211 = arith.addf %185, %210 : vector<2x128xf32>
    %212 = vector.broadcast %205 : vector<1x128xf32> to vector<2x128xf32>
    %213 = arith.mulf %194, %212 : vector<2x128xf32>
    %214 = vector.broadcast %201 : vector<1x128xf32> to vector<2x128xf32>
    %215 = arith.mulf %197, %214 : vector<2x128xf32>
    %216 = arith.addf %213, %215 : vector<2x128xf32>
    %217 = arith.addf %191, %216 : vector<2x128xf32>
    %c4_i32_96 = arith.constant 4 : i32
    %c1 = arith.constant 1 : index
    %c0_97 = arith.constant 0 : index
    %c0_98 = arith.constant 0 : index
    %218 = vector.load %arg6[%c1, %c0_97, %c0_98] : memref<4x2x128xf32, #tpu.memory_space<vmem>>, vector<1x2x128xf32>
    %219 = vector.shape_cast %218 : vector<1x2x128xf32> to vector<2x128xf32>
    %220 = vector.shape_cast %211 : vector<2x128xf32> to vector<1x2x128xf32>
    tpu.vector_store %arg6[%c1, %c0_97, %c0_98], %220 {strides = array<i32>} : memref<4x2x128xf32, #tpu.memory_space<vmem>>, vector<1x2x128xf32>,
    %c1_99 = arith.constant 1 : index
    %c0_100 = arith.constant 0 : index
    %c0_101 = arith.constant 0 : index
    %221 = vector.load %arg7[%c1_99, %c0_100, %c0_101] : memref<4x2x128xf32, #tpu.memory_space<vmem>>, vector<1x2x128xf32>
    %222 = vector.shape_cast %221 : vector<1x2x128xf32> to vector<2x128xf32>
    %223 = vector.shape_cast %217 : vector<2x128xf32> to vector<1x2x128xf32>
    tpu.vector_store %arg7[%c1_99, %c0_100, %c0_101], %223 {strides = array<i32>} : memref<4x2x128xf32, #tpu.memory_space<vmem>>, vector<1x2x128xf32>,
    %cst_102 = arith.constant 0.000000e+00 : f32
    %224 = vector.broadcast %cst_102 : f32 to vector<2x128xf32>
    %cst_103 = arith.constant 0.000000e+00 : f32
    %225 = vector.broadcast %cst_103 : f32 to vector<2x128xf32>
    %c2_i32_104 = arith.constant 2 : i32
    %c2_i32_105 = arith.constant 2 : i32
    %c0_i32_106 = arith.constant 0 : i32
    %226 = arith.index_cast %c0_i32_106 : i32 to index
    %c0_107 = arith.constant 0 : index
    %c0_108 = arith.constant 0 : index
    %227 = vector.load %arg2[%226, %c0_107, %c0_108] : memref<4x2x128xf32, #tpu.memory_space<vmem>>, vector<1x2x128xf32>
    %228 = vector.shape_cast %227 : vector<1x2x128xf32> to vector<2x128xf32>
    %229 = arith.index_cast %c0_i32_106 : i32 to index
    %c0_109 = arith.constant 0 : index
    %c0_110 = arith.constant 0 : index
    %230 = vector.load %arg3[%229, %c0_109, %c0_110] : memref<4x2x128xf32, #tpu.memory_space<vmem>>, vector<1x2x128xf32>
    %231 = vector.shape_cast %230 : vector<1x2x128xf32> to vector<2x128xf32>
    %c0_i32_111 = arith.constant 0 : i32
    %c0_i32_112 = arith.constant 0 : i32
    %232 = tpu.memref_slice %arg4[%c2_i32_104, %c0_i32_111, %c0_i32_112] : memref<4x4x128xf32, #tpu.memory_space<vmem>> -> memref<1x4x128xf32, #tpu.memory_space<vmem>>
    %233 = tpu.memref_squeeze %232 : memref<1x4x128xf32, #tpu.memory_space<vmem>> -> memref<4x128xf32, #tpu.memory_space<vmem>>
    %234 = arith.index_cast %c0_i32_106 : i32 to index
    %c0_113 = arith.constant 0 : index
    %235 = vector.load %233[%234, %c0_113] : memref<4x128xf32, #tpu.memory_space<vmem>>, vector<1x128xf32>
    %c0_i32_114 = arith.constant 0 : i32
    %c0_i32_115 = arith.constant 0 : i32
    %236 = tpu.memref_slice %arg5[%c2_i32_105, %c0_i32_114, %c0_i32_115] : memref<4x4x128xf32, #tpu.memory_space<vmem>> -> memref<1x4x128xf32, #tpu.memory_space<vmem>>
    %237 = tpu.memref_squeeze %236 : memref<1x4x128xf32, #tpu.memory_space<vmem>> -> memref<4x128xf32, #tpu.memory_space<vmem>>
    %238 = arith.index_cast %c0_i32_106 : i32 to index
    %c0_116 = arith.constant 0 : index
    %239 = vector.load %237[%238, %c0_116] : memref<4x128xf32, #tpu.memory_space<vmem>>, vector<1x128xf32>
    %240 = vector.broadcast %235 : vector<1x128xf32> to vector<2x128xf32>
    %241 = arith.mulf %228, %240 : vector<2x128xf32>
    %242 = vector.broadcast %239 : vector<1x128xf32> to vector<2x128xf32>
    %243 = arith.mulf %231, %242 : vector<2x128xf32>
    %244 = arith.subf %241, %243 : vector<2x128xf32>
    %245 = arith.addf %224, %244 : vector<2x128xf32>
    %246 = vector.broadcast %239 : vector<1x128xf32> to vector<2x128xf32>
    %247 = arith.mulf %228, %246 : vector<2x128xf32>
    %248 = vector.broadcast %235 : vector<1x128xf32> to vector<2x128xf32>
    %249 = arith.mulf %231, %248 : vector<2x128xf32>
    %250 = arith.addf %247, %249 : vector<2x128xf32>
    %251 = arith.addf %225, %250 : vector<2x128xf32>
    %c1_i32_117 = arith.constant 1 : i32
    %252 = arith.index_cast %c1_i32_117 : i32 to index
    %c0_118 = arith.constant 0 : index
    %c0_119 = arith.constant 0 : index
    %253 = vector.load %arg2[%252, %c0_118, %c0_119] : memref<4x2x128xf32, #tpu.memory_space<vmem>>, vector<1x2x128xf32>
    %254 = vector.shape_cast %253 : vector<1x2x128xf32> to vector<2x128xf32>
    %255 = arith.index_cast %c1_i32_117 : i32 to index
    %c0_120 = arith.constant 0 : index
    %c0_121 = arith.constant 0 : index
    %256 = vector.load %arg3[%255, %c0_120, %c0_121] : memref<4x2x128xf32, #tpu.memory_space<vmem>>, vector<1x2x128xf32>
    %257 = vector.shape_cast %256 : vector<1x2x128xf32> to vector<2x128xf32>
    %c0_i32_122 = arith.constant 0 : i32
    %c0_i32_123 = arith.constant 0 : i32
    %258 = tpu.memref_slice %arg4[%c2_i32_104, %c0_i32_122, %c0_i32_123] : memref<4x4x128xf32, #tpu.memory_space<vmem>> -> memref<1x4x128xf32, #tpu.memory_space<vmem>>
    %259 = tpu.memref_squeeze %258 : memref<1x4x128xf32, #tpu.memory_space<vmem>> -> memref<4x128xf32, #tpu.memory_space<vmem>>
    %260 = arith.index_cast %c1_i32_117 : i32 to index
    %c0_124 = arith.constant 0 : index
    %261 = vector.load %259[%260, %c0_124] : memref<4x128xf32, #tpu.memory_space<vmem>>, vector<1x128xf32>
    %c0_i32_125 = arith.constant 0 : i32
    %c0_i32_126 = arith.constant 0 : i32
    %262 = tpu.memref_slice %arg5[%c2_i32_105, %c0_i32_125, %c0_i32_126] : memref<4x4x128xf32, #tpu.memory_space<vmem>> -> memref<1x4x128xf32, #tpu.memory_space<vmem>>
    %263 = tpu.memref_squeeze %262 : memref<1x4x128xf32, #tpu.memory_space<vmem>> -> memref<4x128xf32, #tpu.memory_space<vmem>>
    %264 = arith.index_cast %c1_i32_117 : i32 to index
    %c0_127 = arith.constant 0 : index
    %265 = vector.load %263[%264, %c0_127] : memref<4x128xf32, #tpu.memory_space<vmem>>, vector<1x128xf32>
    %266 = vector.broadcast %261 : vector<1x128xf32> to vector<2x128xf32>
    %267 = arith.mulf %254, %266 : vector<2x128xf32>
    %268 = vector.broadcast %265 : vector<1x128xf32> to vector<2x128xf32>
    %269 = arith.mulf %257, %268 : vector<2x128xf32>
    %270 = arith.subf %267, %269 : vector<2x128xf32>
    %271 = arith.addf %245, %270 : vector<2x128xf32>
    %272 = vector.broadcast %265 : vector<1x128xf32> to vector<2x128xf32>
    %273 = arith.mulf %254, %272 : vector<2x128xf32>
    %274 = vector.broadcast %261 : vector<1x128xf32> to vector<2x128xf32>
    %275 = arith.mulf %257, %274 : vector<2x128xf32>
    %276 = arith.addf %273, %275 : vector<2x128xf32>
    %277 = arith.addf %251, %276 : vector<2x128xf32>
    %c2_i32_128 = arith.constant 2 : i32
    %278 = arith.index_cast %c2_i32_128 : i32 to index
    %c0_129 = arith.constant 0 : index
    %c0_130 = arith.constant 0 : index
    %279 = vector.load %arg2[%278, %c0_129, %c0_130] : memref<4x2x128xf32, #tpu.memory_space<vmem>>, vector<1x2x128xf32>
    %280 = vector.shape_cast %279 : vector<1x2x128xf32> to vector<2x128xf32>
    %281 = arith.index_cast %c2_i32_128 : i32 to index
    %c0_131 = arith.constant 0 : index
    %c0_132 = arith.constant 0 : index
    %282 = vector.load %arg3[%281, %c0_131, %c0_132] : memref<4x2x128xf32, #tpu.memory_space<vmem>>, vector<1x2x128xf32>
    %283 = vector.shape_cast %282 : vector<1x2x128xf32> to vector<2x128xf32>
    %c0_i32_133 = arith.constant 0 : i32
    %c0_i32_134 = arith.constant 0 : i32
    %284 = tpu.memref_slice %arg4[%c2_i32_104, %c0_i32_133, %c0_i32_134] : memref<4x4x128xf32, #tpu.memory_space<vmem>> -> memref<1x4x128xf32, #tpu.memory_space<vmem>>
    %285 = tpu.memref_squeeze %284 : memref<1x4x128xf32, #tpu.memory_space<vmem>> -> memref<4x128xf32, #tpu.memory_space<vmem>>
    %286 = arith.index_cast %c2_i32_128 : i32 to index
    %c0_135 = arith.constant 0 : index
    %287 = vector.load %285[%286, %c0_135] : memref<4x128xf32, #tpu.memory_space<vmem>>, vector<1x128xf32>
    %c0_i32_136 = arith.constant 0 : i32
    %c0_i32_137 = arith.constant 0 : i32
    %288 = tpu.memref_slice %arg5[%c2_i32_105, %c0_i32_136, %c0_i32_137] : memref<4x4x128xf32, #tpu.memory_space<vmem>> -> memref<1x4x128xf32, #tpu.memory_space<vmem>>
    %289 = tpu.memref_squeeze %288 : memref<1x4x128xf32, #tpu.memory_space<vmem>> -> memref<4x128xf32, #tpu.memory_space<vmem>>
    %290 = arith.index_cast %c2_i32_128 : i32 to index
    %c0_138 = arith.constant 0 : index
    %291 = vector.load %289[%290, %c0_138] : memref<4x128xf32, #tpu.memory_space<vmem>>, vector<1x128xf32>
    %292 = vector.broadcast %287 : vector<1x128xf32> to vector<2x128xf32>
    %293 = arith.mulf %280, %292 : vector<2x128xf32>
    %294 = vector.broadcast %291 : vector<1x128xf32> to vector<2x128xf32>
    %295 = arith.mulf %283, %294 : vector<2x128xf32>
    %296 = arith.subf %293, %295 : vector<2x128xf32>
    %297 = arith.addf %271, %296 : vector<2x128xf32>
    %298 = vector.broadcast %291 : vector<1x128xf32> to vector<2x128xf32>
    %299 = arith.mulf %280, %298 : vector<2x128xf32>
    %300 = vector.broadcast %287 : vector<1x128xf32> to vector<2x128xf32>
    %301 = arith.mulf %283, %300 : vector<2x128xf32>
    %302 = arith.addf %299, %301 : vector<2x128xf32>
    %303 = arith.addf %277, %302 : vector<2x128xf32>
    %c3_i32_139 = arith.constant 3 : i32
    %304 = arith.index_cast %c3_i32_139 : i32 to index
    %c0_140 = arith.constant 0 : index
    %c0_141 = arith.constant 0 : index
    %305 = vector.load %arg2[%304, %c0_140, %c0_141] : memref<4x2x128xf32, #tpu.memory_space<vmem>>, vector<1x2x128xf32>
    %306 = vector.shape_cast %305 : vector<1x2x128xf32> to vector<2x128xf32>
    %307 = arith.index_cast %c3_i32_139 : i32 to index
    %c0_142 = arith.constant 0 : index
    %c0_143 = arith.constant 0 : index
    %308 = vector.load %arg3[%307, %c0_142, %c0_143] : memref<4x2x128xf32, #tpu.memory_space<vmem>>, vector<1x2x128xf32>
    %309 = vector.shape_cast %308 : vector<1x2x128xf32> to vector<2x128xf32>
    %c0_i32_144 = arith.constant 0 : i32
    %c0_i32_145 = arith.constant 0 : i32
    %310 = tpu.memref_slice %arg4[%c2_i32_104, %c0_i32_144, %c0_i32_145] : memref<4x4x128xf32, #tpu.memory_space<vmem>> -> memref<1x4x128xf32, #tpu.memory_space<vmem>>
    %311 = tpu.memref_squeeze %310 : memref<1x4x128xf32, #tpu.memory_space<vmem>> -> memref<4x128xf32, #tpu.memory_space<vmem>>
    %312 = arith.index_cast %c3_i32_139 : i32 to index
    %c0_146 = arith.constant 0 : index
    %313 = vector.load %311[%312, %c0_146] : memref<4x128xf32, #tpu.memory_space<vmem>>, vector<1x128xf32>
    %c0_i32_147 = arith.constant 0 : i32
    %c0_i32_148 = arith.constant 0 : i32
    %314 = tpu.memref_slice %arg5[%c2_i32_105, %c0_i32_147, %c0_i32_148] : memref<4x4x128xf32, #tpu.memory_space<vmem>> -> memref<1x4x128xf32, #tpu.memory_space<vmem>>
    %315 = tpu.memref_squeeze %314 : memref<1x4x128xf32, #tpu.memory_space<vmem>> -> memref<4x128xf32, #tpu.memory_space<vmem>>
    %316 = arith.index_cast %c3_i32_139 : i32 to index
    %c0_149 = arith.constant 0 : index
    %317 = vector.load %315[%316, %c0_149] : memref<4x128xf32, #tpu.memory_space<vmem>>, vector<1x128xf32>
    %318 = vector.broadcast %313 : vector<1x128xf32> to vector<2x128xf32>
    %319 = arith.mulf %306, %318 : vector<2x128xf32>
    %320 = vector.broadcast %317 : vector<1x128xf32> to vector<2x128xf32>
    %321 = arith.mulf %309, %320 : vector<2x128xf32>
    %322 = arith.subf %319, %321 : vector<2x128xf32>
    %323 = arith.addf %297, %322 : vector<2x128xf32>
    %324 = vector.broadcast %317 : vector<1x128xf32> to vector<2x128xf32>
    %325 = arith.mulf %306, %324 : vector<2x128xf32>
    %326 = vector.broadcast %313 : vector<1x128xf32> to vector<2x128xf32>
    %327 = arith.mulf %309, %326 : vector<2x128xf32>
    %328 = arith.addf %325, %327 : vector<2x128xf32>
    %329 = arith.addf %303, %328 : vector<2x128xf32>
    %c4_i32_150 = arith.constant 4 : i32
    %c2 = arith.constant 2 : index
    %c0_151 = arith.constant 0 : index
    %c0_152 = arith.constant 0 : index
    %330 = vector.load %arg6[%c2, %c0_151, %c0_152] : memref<4x2x128xf32, #tpu.memory_space<vmem>>, vector<1x2x128xf32>
    %331 = vector.shape_cast %330 : vector<1x2x128xf32> to vector<2x128xf32>
    %332 = vector.shape_cast %323 : vector<2x128xf32> to vector<1x2x128xf32>
    tpu.vector_store %arg6[%c2, %c0_151, %c0_152], %332 {strides = array<i32>} : memref<4x2x128xf32, #tpu.memory_space<vmem>>, vector<1x2x128xf32>,
    %c2_153 = arith.constant 2 : index
    %c0_154 = arith.constant 0 : index
    %c0_155 = arith.constant 0 : index
    %333 = vector.load %arg7[%c2_153, %c0_154, %c0_155] : memref<4x2x128xf32, #tpu.memory_space<vmem>>, vector<1x2x128xf32>
    %334 = vector.shape_cast %333 : vector<1x2x128xf32> to vector<2x128xf32>
    %335 = vector.shape_cast %329 : vector<2x128xf32> to vector<1x2x128xf32>
    tpu.vector_store %arg7[%c2_153, %c0_154, %c0_155], %335 {strides = array<i32>} : memref<4x2x128xf32, #tpu.memory_space<vmem>>, vector<1x2x128xf32>,
    %cst_156 = arith.constant 0.000000e+00 : f32
    %336 = vector.broadcast %cst_156 : f32 to vector<2x128xf32>
    %cst_157 = arith.constant 0.000000e+00 : f32
    %337 = vector.broadcast %cst_157 : f32 to vector<2x128xf32>
    %c3_i32_158 = arith.constant 3 : i32
    %c3_i32_159 = arith.constant 3 : i32
    %c0_i32_160 = arith.constant 0 : i32
    %338 = arith.index_cast %c0_i32_160 : i32 to index
    %c0_161 = arith.constant 0 : index
    %c0_162 = arith.constant 0 : index
    %339 = vector.load %arg2[%338, %c0_161, %c0_162] : memref<4x2x128xf32, #tpu.memory_space<vmem>>, vector<1x2x128xf32>
    %340 = vector.shape_cast %339 : vector<1x2x128xf32> to vector<2x128xf32>
    %341 = arith.index_cast %c0_i32_160 : i32 to index
    %c0_163 = arith.constant 0 : index
    %c0_164 = arith.constant 0 : index
    %342 = vector.load %arg3[%341, %c0_163, %c0_164] : memref<4x2x128xf32, #tpu.memory_space<vmem>>, vector<1x2x128xf32>
    %343 = vector.shape_cast %342 : vector<1x2x128xf32> to vector<2x128xf32>
    %c0_i32_165 = arith.constant 0 : i32
    %c0_i32_166 = arith.constant 0 : i32
    %344 = tpu.memref_slice %arg4[%c3_i32_158, %c0_i32_165, %c0_i32_166] : memref<4x4x128xf32, #tpu.memory_space<vmem>> -> memref<1x4x128xf32, #tpu.memory_space<vmem>>
    %345 = tpu.memref_squeeze %344 : memref<1x4x128xf32, #tpu.memory_space<vmem>> -> memref<4x128xf32, #tpu.memory_space<vmem>>
    %346 = arith.index_cast %c0_i32_160 : i32 to index
    %c0_167 = arith.constant 0 : index
    %347 = vector.load %345[%346, %c0_167] : memref<4x128xf32, #tpu.memory_space<vmem>>, vector<1x128xf32>
    %c0_i32_168 = arith.constant 0 : i32
    %c0_i32_169 = arith.constant 0 : i32
    %348 = tpu.memref_slice %arg5[%c3_i32_159, %c0_i32_168, %c0_i32_169] : memref<4x4x128xf32, #tpu.memory_space<vmem>> -> memref<1x4x128xf32, #tpu.memory_space<vmem>>
    %349 = tpu.memref_squeeze %348 : memref<1x4x128xf32, #tpu.memory_space<vmem>> -> memref<4x128xf32, #tpu.memory_space<vmem>>
    %350 = arith.index_cast %c0_i32_160 : i32 to index
    %c0_170 = arith.constant 0 : index
    %351 = vector.load %349[%350, %c0_170] : memref<4x128xf32, #tpu.memory_space<vmem>>, vector<1x128xf32>
    %352 = vector.broadcast %347 : vector<1x128xf32> to vector<2x128xf32>
    %353 = arith.mulf %340, %352 : vector<2x128xf32>
    %354 = vector.broadcast %351 : vector<1x128xf32> to vector<2x128xf32>
    %355 = arith.mulf %343, %354 : vector<2x128xf32>
    %356 = arith.subf %353, %355 : vector<2x128xf32>
    %357 = arith.addf %336, %356 : vector<2x128xf32>
    %358 = vector.broadcast %351 : vector<1x128xf32> to vector<2x128xf32>
    %359 = arith.mulf %340, %358 : vector<2x128xf32>
    %360 = vector.broadcast %347 : vector<1x128xf32> to vector<2x128xf32>
    %361 = arith.mulf %343, %360 : vector<2x128xf32>
    %362 = arith.addf %359, %361 : vector<2x128xf32>
    %363 = arith.addf %337, %362 : vector<2x128xf32>
    %c1_i32_171 = arith.constant 1 : i32
    %364 = arith.index_cast %c1_i32_171 : i32 to index
    %c0_172 = arith.constant 0 : index
    %c0_173 = arith.constant 0 : index
    %365 = vector.load %arg2[%364, %c0_172, %c0_173] : memref<4x2x128xf32, #tpu.memory_space<vmem>>, vector<1x2x128xf32>
    %366 = vector.shape_cast %365 : vector<1x2x128xf32> to vector<2x128xf32>
    %367 = arith.index_cast %c1_i32_171 : i32 to index
    %c0_174 = arith.constant 0 : index
    %c0_175 = arith.constant 0 : index
    %368 = vector.load %arg3[%367, %c0_174, %c0_175] : memref<4x2x128xf32, #tpu.memory_space<vmem>>, vector<1x2x128xf32>
    %369 = vector.shape_cast %368 : vector<1x2x128xf32> to vector<2x128xf32>
    %c0_i32_176 = arith.constant 0 : i32
    %c0_i32_177 = arith.constant 0 : i32
    %370 = tpu.memref_slice %arg4[%c3_i32_158, %c0_i32_176, %c0_i32_177] : memref<4x4x128xf32, #tpu.memory_space<vmem>> -> memref<1x4x128xf32, #tpu.memory_space<vmem>>
    %371 = tpu.memref_squeeze %370 : memref<1x4x128xf32, #tpu.memory_space<vmem>> -> memref<4x128xf32, #tpu.memory_space<vmem>>
    %372 = arith.index_cast %c1_i32_171 : i32 to index
    %c0_178 = arith.constant 0 : index
    %373 = vector.load %371[%372, %c0_178] : memref<4x128xf32, #tpu.memory_space<vmem>>, vector<1x128xf32>
    %c0_i32_179 = arith.constant 0 : i32
    %c0_i32_180 = arith.constant 0 : i32
    %374 = tpu.memref_slice %arg5[%c3_i32_159, %c0_i32_179, %c0_i32_180] : memref<4x4x128xf32, #tpu.memory_space<vmem>> -> memref<1x4x128xf32, #tpu.memory_space<vmem>>
    %375 = tpu.memref_squeeze %374 : memref<1x4x128xf32, #tpu.memory_space<vmem>> -> memref<4x128xf32, #tpu.memory_space<vmem>>
    %376 = arith.index_cast %c1_i32_171 : i32 to index
    %c0_181 = arith.constant 0 : index
    %377 = vector.load %375[%376, %c0_181] : memref<4x128xf32, #tpu.memory_space<vmem>>, vector<1x128xf32>
    %378 = vector.broadcast %373 : vector<1x128xf32> to vector<2x128xf32>
    %379 = arith.mulf %366, %378 : vector<2x128xf32>
    %380 = vector.broadcast %377 : vector<1x128xf32> to vector<2x128xf32>
    %381 = arith.mulf %369, %380 : vector<2x128xf32>
    %382 = arith.subf %379, %381 : vector<2x128xf32>
    %383 = arith.addf %357, %382 : vector<2x128xf32>
    %384 = vector.broadcast %377 : vector<1x128xf32> to vector<2x128xf32>
    %385 = arith.mulf %366, %384 : vector<2x128xf32>
    %386 = vector.broadcast %373 : vector<1x128xf32> to vector<2x128xf32>
    %387 = arith.mulf %369, %386 : vector<2x128xf32>
    %388 = arith.addf %385, %387 : vector<2x128xf32>
    %389 = arith.addf %363, %388 : vector<2x128xf32>
    %c2_i32_182 = arith.constant 2 : i32
    %390 = arith.index_cast %c2_i32_182 : i32 to index
    %c0_183 = arith.constant 0 : index
    %c0_184 = arith.constant 0 : index
    %391 = vector.load %arg2[%390, %c0_183, %c0_184] : memref<4x2x128xf32, #tpu.memory_space<vmem>>, vector<1x2x128xf32>
    %392 = vector.shape_cast %391 : vector<1x2x128xf32> to vector<2x128xf32>
    %393 = arith.index_cast %c2_i32_182 : i32 to index
    %c0_185 = arith.constant 0 : index
    %c0_186 = arith.constant 0 : index
    %394 = vector.load %arg3[%393, %c0_185, %c0_186] : memref<4x2x128xf32, #tpu.memory_space<vmem>>, vector<1x2x128xf32>
    %395 = vector.shape_cast %394 : vector<1x2x128xf32> to vector<2x128xf32>
    %c0_i32_187 = arith.constant 0 : i32
    %c0_i32_188 = arith.constant 0 : i32
    %396 = tpu.memref_slice %arg4[%c3_i32_158, %c0_i32_187, %c0_i32_188] : memref<4x4x128xf32, #tpu.memory_space<vmem>> -> memref<1x4x128xf32, #tpu.memory_space<vmem>>
    %397 = tpu.memref_squeeze %396 : memref<1x4x128xf32, #tpu.memory_space<vmem>> -> memref<4x128xf32, #tpu.memory_space<vmem>>
    %398 = arith.index_cast %c2_i32_182 : i32 to index
    %c0_189 = arith.constant 0 : index
    %399 = vector.load %397[%398, %c0_189] : memref<4x128xf32, #tpu.memory_space<vmem>>, vector<1x128xf32>
    %c0_i32_190 = arith.constant 0 : i32
    %c0_i32_191 = arith.constant 0 : i32
    %400 = tpu.memref_slice %arg5[%c3_i32_159, %c0_i32_190, %c0_i32_191] : memref<4x4x128xf32, #tpu.memory_space<vmem>> -> memref<1x4x128xf32, #tpu.memory_space<vmem>>
    %401 = tpu.memref_squeeze %400 : memref<1x4x128xf32, #tpu.memory_space<vmem>> -> memref<4x128xf32, #tpu.memory_space<vmem>>
    %402 = arith.index_cast %c2_i32_182 : i32 to index
    %c0_192 = arith.constant 0 : index
    %403 = vector.load %401[%402, %c0_192] : memref<4x128xf32, #tpu.memory_space<vmem>>, vector<1x128xf32>
    %404 = vector.broadcast %399 : vector<1x128xf32> to vector<2x128xf32>
    %405 = arith.mulf %392, %404 : vector<2x128xf32>
    %406 = vector.broadcast %403 : vector<1x128xf32> to vector<2x128xf32>
    %407 = arith.mulf %395, %406 : vector<2x128xf32>
    %408 = arith.subf %405, %407 : vector<2x128xf32>
    %409 = arith.addf %383, %408 : vector<2x128xf32>
    %410 = vector.broadcast %403 : vector<1x128xf32> to vector<2x128xf32>
    %411 = arith.mulf %392, %410 : vector<2x128xf32>
    %412 = vector.broadcast %399 : vector<1x128xf32> to vector<2x128xf32>
    %413 = arith.mulf %395, %412 : vector<2x128xf32>
    %414 = arith.addf %411, %413 : vector<2x128xf32>
    %415 = arith.addf %389, %414 : vector<2x128xf32>
    %c3_i32_193 = arith.constant 3 : i32
    %416 = arith.index_cast %c3_i32_193 : i32 to index
    %c0_194 = arith.constant 0 : index
    %c0_195 = arith.constant 0 : index
    %417 = vector.load %arg2[%416, %c0_194, %c0_195] : memref<4x2x128xf32, #tpu.memory_space<vmem>>, vector<1x2x128xf32>
    %418 = vector.shape_cast %417 : vector<1x2x128xf32> to vector<2x128xf32>
    %419 = arith.index_cast %c3_i32_193 : i32 to index
    %c0_196 = arith.constant 0 : index
    %c0_197 = arith.constant 0 : index
    %420 = vector.load %arg3[%419, %c0_196, %c0_197] : memref<4x2x128xf32, #tpu.memory_space<vmem>>, vector<1x2x128xf32>
    %421 = vector.shape_cast %420 : vector<1x2x128xf32> to vector<2x128xf32>
    %c0_i32_198 = arith.constant 0 : i32
    %c0_i32_199 = arith.constant 0 : i32
    %422 = tpu.memref_slice %arg4[%c3_i32_158, %c0_i32_198, %c0_i32_199] : memref<4x4x128xf32, #tpu.memory_space<vmem>> -> memref<1x4x128xf32, #tpu.memory_space<vmem>>
    %423 = tpu.memref_squeeze %422 : memref<1x4x128xf32, #tpu.memory_space<vmem>> -> memref<4x128xf32, #tpu.memory_space<vmem>>
    %424 = arith.index_cast %c3_i32_193 : i32 to index
    %c0_200 = arith.constant 0 : index
    %425 = vector.load %423[%424, %c0_200] : memref<4x128xf32, #tpu.memory_space<vmem>>, vector<1x128xf32>
    %c0_i32_201 = arith.constant 0 : i32
    %c0_i32_202 = arith.constant 0 : i32
    %426 = tpu.memref_slice %arg5[%c3_i32_159, %c0_i32_201, %c0_i32_202] : memref<4x4x128xf32, #tpu.memory_space<vmem>> -> memref<1x4x128xf32, #tpu.memory_space<vmem>>
    %427 = tpu.memref_squeeze %426 : memref<1x4x128xf32, #tpu.memory_space<vmem>> -> memref<4x128xf32, #tpu.memory_space<vmem>>
    %428 = arith.index_cast %c3_i32_193 : i32 to index
    %c0_203 = arith.constant 0 : index
    %429 = vector.load %427[%428, %c0_203] : memref<4x128xf32, #tpu.memory_space<vmem>>, vector<1x128xf32>
    %430 = vector.broadcast %425 : vector<1x128xf32> to vector<2x128xf32>
    %431 = arith.mulf %418, %430 : vector<2x128xf32>
    %432 = vector.broadcast %429 : vector<1x128xf32> to vector<2x128xf32>
    %433 = arith.mulf %421, %432 : vector<2x128xf32>
    %434 = arith.subf %431, %433 : vector<2x128xf32>
    %435 = arith.addf %409, %434 : vector<2x128xf32>
    %436 = vector.broadcast %429 : vector<1x128xf32> to vector<2x128xf32>
    %437 = arith.mulf %418, %436 : vector<2x128xf32>
    %438 = vector.broadcast %425 : vector<1x128xf32> to vector<2x128xf32>
    %439 = arith.mulf %421, %438 : vector<2x128xf32>
    %440 = arith.addf %437, %439 : vector<2x128xf32>
    %441 = arith.addf %415, %440 : vector<2x128xf32>
    %c4_i32_204 = arith.constant 4 : i32
    %c3 = arith.constant 3 : index
    %c0_205 = arith.constant 0 : index
    %c0_206 = arith.constant 0 : index
    %442 = vector.load %arg6[%c3, %c0_205, %c0_206] : memref<4x2x128xf32, #tpu.memory_space<vmem>>, vector<1x2x128xf32>
    %443 = vector.shape_cast %442 : vector<1x2x128xf32> to vector<2x128xf32>
    %444 = vector.shape_cast %435 : vector<2x128xf32> to vector<1x2x128xf32>
    tpu.vector_store %arg6[%c3, %c0_205, %c0_206], %444 {strides = array<i32>} : memref<4x2x128xf32, #tpu.memory_space<vmem>>, vector<1x2x128xf32>,
    %c3_207 = arith.constant 3 : index
    %c0_208 = arith.constant 0 : index
    %c0_209 = arith.constant 0 : index
    %445 = vector.load %arg7[%c3_207, %c0_208, %c0_209] : memref<4x2x128xf32, #tpu.memory_space<vmem>>, vector<1x2x128xf32>
    %446 = vector.shape_cast %445 : vector<1x2x128xf32> to vector<2x128xf32>
    %447 = vector.shape_cast %441 : vector<2x128xf32> to vector<1x2x128xf32>
    tpu.vector_store %arg7[%c3_207, %c0_208, %c0_209], %447 {strides = array<i32>} : memref<4x2x128xf32, #tpu.memory_space<vmem>>, vector<1x2x128xf32>,
    return
  }
  func.func @transform_0(%arg0: i32, %arg1: i32) -> (i32, i32, i32) {
    %c0_i32 = arith.constant 0 : i32
    %c0_i32_0 = arith.constant 0 : i32
    %c0_i32_1 = arith.constant 0 : i32
    return %c0_i32, %arg1, %c0_i32_0 : i32, i32, i32
  }
  func.func @transform_1(%arg0: i32, %arg1: i32) -> (i32, i32, i32) {
    %c0_i32 = arith.constant 0 : i32
    %c0_i32_0 = arith.constant 0 : i32
    %c0_i32_1 = arith.constant 0 : i32
    return %c0_i32, %arg1, %c0_i32_0 : i32, i32, i32
  }
  func.func @transform_2(%arg0: i32, %arg1: i32) -> (i32, i32, i32) {
    %c0_i32 = arith.constant 0 : i32
    %c0_i32_0 = arith.constant 0 : i32
    %c0_i32_1 = arith.constant 0 : i32
    return %arg0, %c0_i32, %c0_i32_0 : i32, i32, i32
  }
  func.func @transform_3(%arg0: i32, %arg1: i32) -> (i32, i32, i32) {
    %c0_i32 = arith.constant 0 : i32
    %c0_i32_0 = arith.constant 0 : i32
    %c0_i32_1 = arith.constant 0 : i32
    return %arg0, %c0_i32, %c0_i32_0 : i32, i32, i32
  }
  func.func @transform_4(%arg0: i32, %arg1: i32) -> (i32, i32, i32) {
    %c0_i32 = arith.constant 0 : i32
    %c0_i32_0 = arith.constant 0 : i32
    return %arg0, %arg1, %c0_i32 : i32, i32, i32
  }
  func.func @transform_5(%arg0: i32, %arg1: i32) -> (i32, i32, i32) {
    %c0_i32 = arith.constant 0 : i32
    %c0_i32_0 = arith.constant 0 : i32
    return %arg0, %arg1, %c0_i32 : i32, i32, i32
  }
}

module attributes {stable_mosaic.version = 11 : i64} {
  func.func @_conv1x1_add_kernel(%arg0: i32, %arg1: i32, %arg2: memref<4x4xf32, #tpu.memory_space<vmem>>, %arg3: memref<4x1xf32, #tpu.memory_space<vmem>>, %arg4: memref<1x4x256xf32, #tpu.memory_space<vmem>>, %arg5: memref<1x4x256xf32, #tpu.memory_space<vmem>>, %arg6: memref<1x4x256xf32, #tpu.memory_space<vmem>>) attributes {dimension_semantics = [#tpu.dimension_semantics<parallel>, #tpu.dimension_semantics<parallel>], iteration_bounds = array<i64: 1, 2>, scalar_prefetch = 0 : i64, scratch_operands = 0 : i64, tpu.core_type = #tpu.core_type<tc>, window_params = [{pipeline_mode = #tpu.pipeline_mode<synchronous>, transform_indices = @transform_0, window_bounds = array<i64: 4, 4>}, {pipeline_mode = #tpu.pipeline_mode<synchronous>, transform_indices = @transform_1, window_bounds = array<i64: 4, 1>}, {transform_indices = @transform_2, window_bounds = array<i64: 1, 4, 256>}, {transform_indices = @transform_3, window_bounds = array<i64: 1, 4, 256>}, {transform_indices = @transform_4, window_bounds = array<i64: 1, 4, 256>}]} {
    %c0 = arith.constant 0 : index
    %c0_0 = arith.constant 0 : index
    %0 = vector.load %arg2[%c0, %c0_0] : memref<4x4xf32, #tpu.memory_space<vmem>>, vector<4x4xf32>
    %c0_1 = arith.constant 0 : index
    %c0_2 = arith.constant 0 : index
    %c0_3 = arith.constant 0 : index
    %1 = vector.load %arg4[%c0_1, %c0_2, %c0_3] : memref<1x4x256xf32, #tpu.memory_space<vmem>>, vector<1x4x256xf32>
    %2 = vector.shape_cast %1 : vector<1x4x256xf32> to vector<4x256xf32>
    %cst = arith.constant dense<0.000000e+00> : vector<4x256xf32>
    %3 = tpu.matmul %0, %2, %cst {dimension_numbers = #tpu.dot_dimension_numbers<[1], [0], [0], [1], [0, 0, 1, 1], [], []>} : vector<4x4xf32>, vector<4x256xf32>, vector<4x256xf32> -> vector<4x256xf32>
    %c0_4 = arith.constant 0 : index
    %c0_5 = arith.constant 0 : index
    %4 = vector.load %arg3[%c0_4, %c0_5] : memref<4x1xf32, #tpu.memory_space<vmem>>, vector<4x1xf32>
    %5 = vector.broadcast %4 : vector<4x1xf32> to vector<4x256xf32>
    %6 = arith.addf %3, %5 : vector<4x256xf32>
    %c0_6 = arith.constant 0 : index
    %c0_7 = arith.constant 0 : index
    %c0_8 = arith.constant 0 : index
    %7 = vector.load %arg5[%c0_6, %c0_7, %c0_8] : memref<1x4x256xf32, #tpu.memory_space<vmem>>, vector<1x4x256xf32>
    %8 = vector.shape_cast %7 : vector<1x4x256xf32> to vector<4x256xf32>
    %9 = arith.addf %6, %8 : vector<4x256xf32>
    %c0_9 = arith.constant 0 : index
    %c0_10 = arith.constant 0 : index
    %c0_11 = arith.constant 0 : index
    %10 = vector.load %arg6[%c0_9, %c0_10, %c0_11] : memref<1x4x256xf32, #tpu.memory_space<vmem>>, vector<1x4x256xf32>
    %11 = vector.shape_cast %10 : vector<1x4x256xf32> to vector<4x256xf32>
    %12 = vector.shape_cast %9 : vector<4x256xf32> to vector<1x4x256xf32>
    tpu.vector_store %arg6[%c0_9, %c0_10, %c0_11], %12 {strides = array<i32>} : memref<1x4x256xf32, #tpu.memory_space<vmem>>, vector<1x4x256xf32>,
    return
  }
  func.func @transform_0(%arg0: i32, %arg1: i32) -> (i32, i32) {
    %c0_i32 = arith.constant 0 : i32
    %c0_i32_0 = arith.constant 0 : i32
    %c0_i32_1 = arith.constant 0 : i32
    return %c0_i32, %c0_i32_0 : i32, i32
  }
  func.func @transform_1(%arg0: i32, %arg1: i32) -> (i32, i32) {
    %c0_i32 = arith.constant 0 : i32
    %c0_i32_0 = arith.constant 0 : i32
    %c0_i32_1 = arith.constant 0 : i32
    return %c0_i32, %c0_i32_0 : i32, i32
  }
  func.func @transform_2(%arg0: i32, %arg1: i32) -> (i32, i32, i32) {
    %c0_i32 = arith.constant 0 : i32
    %c0_i32_0 = arith.constant 0 : i32
    return %arg1, %c0_i32, %arg0 : i32, i32, i32
  }
  func.func @transform_3(%arg0: i32, %arg1: i32) -> (i32, i32, i32) {
    %c0_i32 = arith.constant 0 : i32
    %c0_i32_0 = arith.constant 0 : i32
    return %arg1, %c0_i32, %arg0 : i32, i32, i32
  }
  func.func @transform_4(%arg0: i32, %arg1: i32) -> (i32, i32, i32) {
    %c0_i32 = arith.constant 0 : i32
    %c0_i32_0 = arith.constant 0 : i32
    return %arg1, %c0_i32, %arg0 : i32, i32, i32
  }
}

</mosaic_0001>

<llo_original>
// kernel: custom-call
$region0: #{custom-call}
  %s0 = inlined_call_operand.hbm [shape: c64[4,4,4,4], index: 0, kind: input, shape index: {}]
  %s1 = inlined_call_operand.vmem [shape: f32[4,4,4,4], index: 1, kind: output, shape index: {}]
  $region1: #{custom-call} parent=0
    #allocation0 [shape = 's32[1]{0}', space=sflag, size = 0x4, scoped, tag = 'scoped memory for custom-call']
    %2 = vsyncpa [#allocation0], 0
    %s3 = sshll.u32 %s1, 4
    %s4 = int_to_ptr.vmem [resolvable:$true] %s3
    %6 = dma.hbm_to_vmem [thread:$0]  %s0, 1024, %s4, [#allocation0]
    %7 = dma.done [#allocation0], 1024
    %8 = vsyncpa [#allocation0], 1

// kernel: custom-call.1
$region0: #{custom-call.1}
  %s0 = inlined_call_operand.hbm [shape: c64[4,4,4,4], index: 0, kind: input, shape index: {}]
  %s1 = inlined_call_operand.vmem [shape: f32[4,4,4,4], index: 1, kind: output, shape index: {}]
  %s2 = scalar_lea.hbm %s0, 1024
  $region1: #{custom-call.1} parent=0
    #allocation0 [shape = 's32[1]{0}', space=sflag, size = 0x4, scoped, tag = 'scoped memory for custom-call.1']
    %3 = vsyncpa [#allocation0], 0
    %s4 = sshll.u32 %s1, 4
    %s5 = int_to_ptr.vmem [resolvable:$true] %s4
    %7 = dma.hbm_to_vmem [thread:$0]  %s2, 1024, %s5, [#allocation0]
    %8 = dma.done [#allocation0], 1024
    %9 = vsyncpa [#allocation0], 1

// kernel: reverse.0
$region0: #{reverse.0}
  %s0 = inlined_call_operand.vmem [shape: f32[2,4,16,7], index: 0, kind: input, shape index: {}]
  %s1 = inlined_call_operand.vmem [shape: f32[2,4,16,7], index: 1, kind: output, shape index: {}]
  $region1: #{reverse.0} parent=0
    #allocation0 [shape = 'u8[65536]{0}', space=vmem, size = 0x10000, scoped, tag = 'operand span for operand 0']
    #allocation1 [shape = 'u8[32768]{0}', space=vmem, size = 0x8000, scoped, tag = 'operand span for operand 1']
    %s2 = scalar_lea.vmem [#allocation0], 8
    // Predicated region
    $region2: #{reverse.0} parent=1 // pred_check
      _
    $region3: #{reverse.0} parent=1 // pred_check_branch
      %4 = sbr.rel (0) target = $region5
    $region4: #{reverse.0} parent=1 // pred_region
      // Predicated region
      $region6: #{reverse.0} parent=4 // pred_check
        _
      $region7: #{reverse.0} parent=4 // pred_check_branch
        %6 = sbr.rel (0) target = $region9
      $region8: #{reverse.0} parent=4 // pred_region
        // Predicated region
        $region21: #{reverse.0} parent=8 // pred_check
          _
        $region22: #{reverse.0} parent=8 // pred_check_branch
          %35 = sbr.rel (0) target = $region24
        $region23: #{reverse.0} parent=8 // pred_region
          loop: start=0, step=1, limit=1
          $region25: #{reverse.0} parent=23 // loop_pre_header
            _
          $region26: #{reverse.0} parent=23 // loop_header
            %s37 = sphi 0, %s41
            %p38 = scmp.ge.s32.totalorder %s37, 1
            %s42 = sphi %s0, %s0
            %s43 = sphi %s2, %s2
          $region27: #{reverse.0} parent=23 // loop_header_branch
            %40 = sbr.rel (%p38) target = $region31
          $region28: #{reverse.0} parent=23 // loop_body
            %v44 = vld [vmem:[%s42] sm:$0xff]
            %45 = vst [vmem:[%s43] sm:$0xff] %v44
            %v46 = vld [vmem:[%s42 + $0x8] sm:$0xff]
            %47 = vst [vmem:[%s43 + $0x10] sm:$0xff] %v46
            %v48 = vld [vmem:[%s42 + $0x10] sm:$0xff]
            %49 = vst [vmem:[%s43 + $0x20] sm:$0xff] %v48
            %v50 = vld [vmem:[%s42 + $0x18] sm:$0xff]
            %51 = vst [vmem:[%s43 + $0x30] sm:$0xff] %v50
            %v52 = vld [vmem:[%s42 + $0x20] sm:$0xff]
            %53 = vst [vmem:[%s43 + $0x40] sm:$0xff] %v52
            %v54 = vld [vmem:[%s42 + $0x28] sm:$0xff]
            %55 = vst [vmem:[%s43 + $0x50] sm:$0xff] %v54
            %v56 = vld [vmem:[%s42 + $0x30] sm:$0xff]
            %57 = vst [vmem:[%s43 + $0x60] sm:$0xff] %v56
            %v58 = vld [vmem:[%s42 + $0x38] sm:$0xff]
            %59 = vst [vmem:[%s43 + $0x70] sm:$0xff] %v58
          $region29: #{reverse.0} parent=23 // loop_footer
            %s41 = sadd.s32 1, %s37
          $region30: #{reverse.0} parent=23 // loop_footer_branch
            %36 = sbr.rel target = $region26
          $region31: #{reverse.0} parent=23 // loop_exit
            _
        $region24: #{reverse.0} parent=8 // pred_fallthru
          _
        // Predicated region
        $region32: #{reverse.0} parent=8 // pred_check
          _
        $region33: #{reverse.0} parent=8 // pred_check_branch
          %61 = sbr.rel target = $region35
        $region34: #{reverse.0} parent=8 // pred_region
          _
        $region35: #{reverse.0} parent=8 // pred_fallthru
          _
      $region9: #{reverse.0} parent=4 // pred_fallthru
        _
      // Predicated region
      $region10: #{reverse.0} parent=4 // pred_check
        _
      $region11: #{reverse.0} parent=4 // pred_check_branch
        %8 = sbr.rel target = $region13
      $region12: #{reverse.0} parent=4 // pred_region
        loop: start=0, step=1, limit=1
        $region14: #{reverse.0} parent=12 // loop_pre_header
          _
        $region15: #{reverse.0} parent=12 // loop_header
          %s11 = sphi 0, %s15
          %p12 = scmp.ge.s32.totalorder %s11, 1
          %s16 = sphi %s0, %s0
          %s17 = sphi %s2, %s2
        $region16: #{reverse.0} parent=12 // loop_header_branch
          %14 = sbr.rel (%p12) target = $region20
        $region17: #{reverse.0} parent=12 // loop_body
          %v18 = vld [vmem:[%s16] sm:$0xff]
          %19 = vst [vmem:[%s17] sm:$0xff] %v18
          %v20 = vld [vmem:[%s16 + $0x8] sm:$0xff]
          %21 = vst [vmem:[%s17 + $0x10] sm:$0xff] %v20
          %v22 = vld [vmem:[%s16 + $0x10] sm:$0xff]
          %23 = vst [vmem:[%s17 + $0x20] sm:$0xff] %v22
          %v24 = vld [vmem:[%s16 + $0x18] sm:$0xff]
          %25 = vst [vmem:[%s17 + $0x30] sm:$0xff] %v24
          %v26 = vld [vmem:[%s16 + $0x20] sm:$0xff]
          %27 = vst [vmem:[%s17 + $0x40] sm:$0xff] %v26
          %v28 = vld [vmem:[%s16 + $0x28] sm:$0xff]
          %29 = vst [vmem:[%s17 + $0x50] sm:$0xff] %v28
          %v30 = vld [vmem:[%s16 + $0x30] sm:$0xff]
          %31 = vst [vmem:[%s17 + $0x60] sm:$0xff] %v30
          %v32 = vld [vmem:[%s16 + $0x38] sm:$0xff]
          %33 = vst [vmem:[%s17 + $0x70] sm:$0xff] %v32
        $region18: #{reverse.0} parent=12 // loop_footer
          %s15 = sadd.s32 1, %s11
        $region19: #{reverse.0} parent=12 // loop_footer_branch
          %10 = sbr.rel target = $region15
        $region20: #{reverse.0} parent=12 // loop_exit
          _
      $region13: #{reverse.0} parent=4 // pred_fallthru
        _
    $region5: #{reverse.0} parent=1 // pred_fallthru
      _
    %62 = vnop
    %s63 = scalar_lea.vmem [#allocation0], 7
    %v64 = vld [vmem:[%s63] ss:$-1 sm:$0xff]
    %v65 = vrot.slane %v64, 1
    %66 = vst [vmem:[#allocation1] sm:$0xff] %v65
    %s67 = scalar_lea.vmem [#allocation0], 8
    %s68 = scalar_lea.vmem %s67, 7 [#allocation0]
    %v69 = vld [vmem:[%s68] ss:$-1 sm:$0xff]
    %v70 = vrot.slane %v69, 1
    %v71 = vlaneseq
    %v72 = vshrl.u32 %v71, 7
    %vm73 = vcmp.lt.s32.totalorder %v72, 7
    %74 = vst.msk [vmem:[#allocation1] sm:$0xff] %vm73, %v70
    %s75 = scalar_lea.vmem [#allocation1], 8
    %s76 = scalar_lea.vmem [#allocation0], 16
    %s77 = scalar_lea.vmem %s76, 7 [#allocation0]
    %v78 = vld [vmem:[%s77] ss:$-1 sm:$0xff]
    %v79 = vrot.slane %v78, 1
    %80 = vst [vmem:[%s75] sm:$0xff] %v79
    %s81 = scalar_lea.vmem %s76, 8 [#allocation0]
    %s82 = scalar_lea.vmem %s81, 7 [#allocation0]
    %v83 = vld [vmem:[%s82] ss:$-1 sm:$0xff]
    %v84 = vrot.slane %v83, 1
    %v85 = vlaneseq
    %v86 = vshrl.u32 %v85, 7
    %vm87 = vcmp.lt.s32.totalorder %v86, 7
    %88 = vst.msk [vmem:[%s75] sm:$0xff] %vm87, %v84
    %s89 = scalar_lea.vmem [#allocation1], 16
    %s90 = scalar_lea.vmem [#allocation0], 32
    %s91 = scalar_lea.vmem %s90, 7 [#allocation0]
    %v92 = vld [vmem:[%s91] ss:$-1 sm:$0xff]
    %v93 = vrot.slane %v92, 1
    %94 = vst [vmem:[%s89] sm:$0xff] %v93
    %s95 = scalar_lea.vmem %s90, 8 [#allocation0]
    %s96 = scalar_lea.vmem %s95, 7 [#allocation0]
    %v97 = vld [vmem:[%s96] ss:$-1 sm:$0xff]
    %v98 = vrot.slane %v97, 1
    %v99 = vlaneseq
    %v100 = vshrl.u32 %v99, 7
    %vm101 = vcmp.lt.s32.totalorder %v100, 7
    %102 = vst.msk [vmem:[%s89] sm:$0xff] %vm101, %v98
    %s103 = scalar_lea.vmem [#allocation1], 24
    %s104 = scalar_lea.vmem [#allocation0], 48
    %s105 = scalar_lea.vmem %s104, 7 [#allocation0]
    %v106 = vld [vmem:[%s105] ss:$-1 sm:$0xff]
    %v107 = vrot.slane %v106, 1
    %108 = vst [vmem:[%s103] sm:$0xff] %v107
    %s109 = scalar_lea.vmem %s104, 8 [#allocation0]
    %s110 = scalar_lea.vmem %s109, 7 [#allocation0]
    %v111 = vld [vmem:[%s110] ss:$-1 sm:$0xff]
    %v112 = vrot.slane %v111, 1
    %v113 = vlaneseq
    %v114 = vshrl.u32 %v113, 7
    %vm115 = vcmp.lt.s32.totalorder %v114, 7
    %116 = vst.msk [vmem:[%s103] sm:$0xff] %vm115, %v112
    %s117 = scalar_lea.vmem [#allocation1], 32
    %s118 = scalar_lea.vmem [#allocation0], 64
    %s119 = scalar_lea.vmem %s118, 7 [#allocation0]
    %v120 = vld [vmem:[%s119] ss:$-1 sm:$0xff]
    %v121 = vrot.slane %v120, 1
    %122 = vst [vmem:[%s117] sm:$0xff] %v121
    %s123 = scalar_lea.vmem %s118, 8 [#allocation0]
    %s124 = scalar_lea.vmem %s123, 7 [#allocation0]
    %v125 = vld [vmem:[%s124] ss:$-1 sm:$0xff]
    %v126 = vrot.slane %v125, 1
    %v127 = vlaneseq
    %v128 = vshrl.u32 %v127, 7
    %vm129 = vcmp.lt.s32.totalorder %v128, 7
    %130 = vst.msk [vmem:[%s117] sm:$0xff] %vm129, %v126
    %s131 = scalar_lea.vmem [#allocation1], 40
    %s132 = scalar_lea.vmem [#allocation0], 80
    %s133 = scalar_lea.vmem %s132, 7 [#allocation0]
    %v134 = vld [vmem:[%s133] ss:$-1 sm:$0xff]
    %v135 = vrot.slane %v134, 1
    %136 = vst [vmem:[%s131] sm:$0xff] %v135
    %s137 = scalar_lea.vmem %s132, 8 [#allocation0]
    %s138 = scalar_lea.vmem %s137, 7 [#allocation0]
    %v139 = vld [vmem:[%s138] ss:$-1 sm:$0xff]
    %v140 = vrot.slane %v139, 1
    %v141 = vlaneseq
    %v142 = vshrl.u32 %v141, 7
    %vm143 = vcmp.lt.s32.totalorder %v142, 7
    %144 = vst.msk [vmem:[%s131] sm:$0xff] %vm143, %v140
    %s145 = scalar_lea.vmem [#allocation1], 48
    %s146 = scalar_lea.vmem [#allocation0], 96
    %s147 = scalar_lea.vmem %s146, 7 [#allocation0]
    %v148 = vld [vmem:[%s147] ss:$-1 sm:$0xff]
    %v149 = vrot.slane %v148, 1
    %150 = vst [vmem:[%s145] sm:$0xff] %v149
    %s151 = scalar_lea.vmem %s146, 8 [#allocation0]
    %s152 = scalar_lea.vmem %s151, 7 [#allocation0]
    %v153 = vld [vmem:[%s152] ss:$-1 sm:$0xff]
    %v154 = vrot.slane %v153, 1
    %v155 = vlaneseq
    %v156 = vshrl.u32 %v155, 7
    %vm157 = vcmp.lt.s32.totalorder %v156, 7
    %158 = vst.msk [vmem:[%s145] sm:$0xff] %vm157, %v154
    %s159 = scalar_lea.vmem [#allocation1], 56
    %s160 = scalar_lea.vmem [#allocation0], 112
    %s161 = scalar_lea.vmem %s160, 7 [#allocation0]
    %v162 = vld [vmem:[%s161] ss:$-1 sm:$0xff]
    %v163 = vrot.slane %v162, 1
    %164 = vst [vmem:[%s159] sm:$0xff] %v163
    %s165 = scalar_lea.vmem %s160, 8 [#allocation0]
    %s166 = scalar_lea.vmem %s165, 7 [#allocation0]
    %v167 = vld [vmem:[%s166] ss:$-1 sm:$0xff]
    %v168 = vrot.slane %v167, 1
    %v169 = vlaneseq
    %v170 = vshrl.u32 %v169, 7
    %vm171 = vcmp.lt.s32.totalorder %v170, 7
    %172 = vst.msk [vmem:[%s159] sm:$0xff] %vm171, %v168
    // Predicated region
    $region36: #{reverse.0} parent=1 // pred_check
      _
    $region37: #{reverse.0} parent=1 // pred_check_branch
      %174 = sbr.rel (0) target = $region39
    $region38: #{reverse.0} parent=1 // pred_region
      // Predicated region
      $region40: #{reverse.0} parent=38 // pred_check
        _
      $region41: #{reverse.0} parent=38 // pred_check_branch
        %176 = sbr.rel (0) target = $region43
      $region42: #{reverse.0} parent=38 // pred_region
        // Predicated region
        $region55: #{reverse.0} parent=42 // pred_check
          _
        $region56: #{reverse.0} parent=42 // pred_check_branch
          %205 = sbr.rel (0) target = $region58
        $region57: #{reverse.0} parent=42 // pred_region
          loop: start=0, step=1, limit=1
          $region59: #{reverse.0} parent=57 // loop_pre_header
            _
          $region60: #{reverse.0} parent=57 // loop_header
            %s207 = sphi 0, %s211
            %p208 = scmp.ge.s32.totalorder %s207, 1
            %s212 = sphi [#allocation1], [#allocation1]
            %s213 = sphi %s1, %s1
          $region61: #{reverse.0} parent=57 // loop_header_branch
            %210 = sbr.rel (%p208) target = $region65
          $region62: #{reverse.0} parent=57 // loop_body
            %v214 = vld [vmem:[%s212] sm:$0xff]
            %215 = vst [vmem:[%s213] sm:$0xff] %v214
            %v216 = vld [vmem:[%s212 + $0x8] sm:$0xff]
            %217 = vst [vmem:[%s213 + $0x8] sm:$0xff] %v216
            %v218 = vld [vmem:[%s212 + $0x10] sm:$0xff]
            %219 = vst [vmem:[%s213 + $0x10] sm:$0xff] %v218
            %v220 = vld [vmem:[%s212 + $0x18] sm:$0xff]
            %221 = vst [vmem:[%s213 + $0x18] sm:$0xff] %v220
            %v222 = vld [vmem:[%s212 + $0x20] sm:$0xff]
            %223 = vst [vmem:[%s213 + $0x20] sm:$0xff] %v222
            %v224 = vld [vmem:[%s212 + $0x28] sm:$0xff]
            %225 = vst [vmem:[%s213 + $0x28] sm:$0xff] %v224
            %v226 = vld [vmem:[%s212 + $0x30] sm:$0xff]
            %227 = vst [vmem:[%s213 + $0x30] sm:$0xff] %v226
            %v228 = vld [vmem:[%s212 + $0x38] sm:$0xff]
            %229 = vst [vmem:[%s213 + $0x38] sm:$0xff] %v228
          $region63: #{reverse.0} parent=57 // loop_footer
            %s211 = sadd.s32 1, %s207
          $region64: #{reverse.0} parent=57 // loop_footer_branch
            %206 = sbr.rel target = $region60
          $region65: #{reverse.0} parent=57 // loop_exit
            _
        $region58: #{reverse.0} parent=42 // pred_fallthru
          _
        // Predicated region
        $region66: #{reverse.0} parent=42 // pred_check
          _
        $region67: #{reverse.0} parent=42 // pred_check_branch
          %231 = sbr.rel target = $region69
        $region68: #{reverse.0} parent=42 // pred_region
          _
        $region69: #{reverse.0} parent=42 // pred_fallthru
          _
      $region43: #{reverse.0} parent=38 // pred_fallthru
        _
      // Predicated region
      $region44: #{reverse.0} parent=38 // pred_check
        _
      $region45: #{reverse.0} parent=38 // pred_check_branch
        %178 = sbr.rel target = $region47
      $region46: #{reverse.0} parent=38 // pred_region
        loop: start=0, step=1, limit=1
        $region48: #{reverse.0} parent=46 // loop_pre_header
          _
        $region49: #{reverse.0} parent=46 // loop_header
          %s181 = sphi 0, %s185
          %p182 = scmp.ge.s32.totalorder %s181, 1
          %s186 = sphi [#allocation1], [#allocation1]
          %s187 = sphi %s1, %s1
        $region50: #{reverse.0} parent=46 // loop_header_branch
          %184 = sbr.rel (%p182) target = $region54
        $region51: #{reverse.0} parent=46 // loop_body
          %v188 = vld [vmem:[%s186] sm:$0xff]
          %189 = vst [vmem:[%s187] sm:$0xff] %v188
          %v190 = vld [vmem:[%s186 + $0x8] sm:$0xff]
          %191 = vst [vmem:[%s187 + $0x8] sm:$0xff] %v190
          %v192 = vld [vmem:[%s186 + $0x10] sm:$0xff]
          %193 = vst [vmem:[%s187 + $0x10] sm:$0xff] %v192
          %v194 = vld [vmem:[%s186 + $0x18] sm:$0xff]
          %195 = vst [vmem:[%s187 + $0x18] sm:$0xff] %v194
          %v196 = vld [vmem:[%s186 + $0x20] sm:$0xff]
          %197 = vst [vmem:[%s187 + $0x20] sm:$0xff] %v196
          %v198 = vld [vmem:[%s186 + $0x28] sm:$0xff]
          %199 = vst [vmem:[%s187 + $0x28] sm:$0xff] %v198
          %v200 = vld [vmem:[%s186 + $0x30] sm:$0xff]
          %201 = vst [vmem:[%s187 + $0x30] sm:$0xff] %v200
          %v202 = vld [vmem:[%s186 + $0x38] sm:$0xff]
          %203 = vst [vmem:[%s187 + $0x38] sm:$0xff] %v202
        $region52: #{reverse.0} parent=46 // loop_footer
          %s185 = sadd.s32 1, %s181
        $region53: #{reverse.0} parent=46 // loop_footer_branch
          %180 = sbr.rel target = $region49
        $region54: #{reverse.0} parent=46 // loop_exit
          _
      $region47: #{reverse.0} parent=38 // pred_fallthru
        _
    $region39: #{reverse.0} parent=1 // pred_fallthru
      _
    %232 = vnop

// kernel: fno2d_forward.2
$region0: #{fno2d_forward.2}
  #allocation0 [shape = 'u32[]', space=smem, size = 0x4, offset = 0x4, fixed_abs, tag = 'smem constant byte address 0x4 - core index']
  #allocation1 [shape = 'u32[144,128]{1,0:T(1,128)}', space=vmem, size = 0x12000, scoped, tag = 'internal scratch']
  %s0 = inlined_call_operand.vmem [shape: f32[4,2,128], index: 0, kind: input, shape index: {}]
  %s1 = inlined_call_operand.vmem [shape: f32[4,2,128], index: 1, kind: input, shape index: {}]
  %s2 = inlined_call_operand.vmem [shape: f32[4,4,128], index: 2, kind: input, shape index: {}]
  %s3 = inlined_call_operand.vmem [shape: f32[4,4,128], index: 3, kind: input, shape index: {}]
  %s4 = inlined_call_operand.vmem [shape: f32[4,2,128], index: 4, kind: output, shape index: {0}]
  %s5 = inlined_call_operand.vmem [shape: f32[4,2,128], index: 5, kind: output, shape index: {1}]
  %6 = xla_tuple %s4, %s5
  %s7 = sld [smem:[#allocation0]]
  $region34: #{fno2d_forward.2} parent=0
    _
  %s9 = ssub.s32 1, %s7
  %s10 = scalar_select 0, %s9, %s7
  // Predicated region
  $region2: #{fno2d_forward.2} parent=0 // pred_check
    _
  $region3: #{fno2d_forward.2} parent=0 // pred_check_branch
    %12 = sbr.rel (0) target = $region5
  $region4: #{fno2d_forward.2} parent=0 // pred_region
    _
  $region5: #{fno2d_forward.2} parent=0 // pred_fallthru
    _
  // Predicated region
  $region6: #{fno2d_forward.2} parent=0 // pred_check
    _
  $region7: #{fno2d_forward.2} parent=0 // pred_check_branch
    %14 = sbr.rel (0) target = $region9
  $region8: #{fno2d_forward.2} parent=0 // pred_region
    _
  $region9: #{fno2d_forward.2} parent=0 // pred_fallthru
    _
  // Predicated region
  $region10: #{fno2d_forward.2} parent=0 // pred_check
    _
  $region11: #{fno2d_forward.2} parent=0 // pred_check_branch
    %16 = sbr.rel (0) target = $region13
  $region12: #{fno2d_forward.2} parent=0 // pred_region
    _
  $region13: #{fno2d_forward.2} parent=0 // pred_fallthru
    _
  // Predicated region
  $region14: #{fno2d_forward.2} parent=0 // pred_check
    _
  $region15: #{fno2d_forward.2} parent=0 // pred_check_branch
    %18 = sbr.rel (0) target = $region17
  $region16: #{fno2d_forward.2} parent=0 // pred_region
    _
  $region17: #{fno2d_forward.2} parent=0 // pred_fallthru
    _
  %v19 = vld [vmem:[%s0] sm:$0x3]
  %v20 = vld [vmem:[%s1] sm:$0x3]
  %v21 = vld [vmem:[%s2] sm:$0x1]
  %v22 = vld [vmem:[%s3] sm:$0x1]
  %v23 = vlaneseq
  %v24 = vshrl.u32 %v23, 7
  %v25 = vsub.s32 0, %v24
  %v26 = vrot.slane %v21, %v25
  %v27 = vmul.f32 %v19, %v26
  %v28 = vlaneseq
  %v29 = vshrl.u32 %v28, 7
  %v30 = vsub.s32 0, %v29
  %v31 = vrot.slane %v22, %v30
  %v32 = vmul.f32 %v20, %v31
  %v33 = vsub.f32 %v27, %v32
  %v34 = vadd.f32 %v33, 0.0
  %v35 = vmul.f32 %v19, %v31
  %v36 = vmul.f32 %v20, %v26
  %v37 = vadd.f32 %v35, %v36
  %v38 = vadd.f32 %v37, 0.0
  %s39 = scalar_lea.vmem %s0, 2
  %v40 = vld [vmem:[%s39] sm:$0x3]
  %s41 = scalar_lea.vmem %s1, 2
  %v42 = vld [vmem:[%s41] sm:$0x3]
  %v43 = vld [vmem:[%s2 + $0x1] sm:$0x1]
  %v44 = vld [vmem:[%s3 + $0x1] sm:$0x1]
  %v45 = vlaneseq
  %v46 = vshrl.u32 %v45, 7
  %v47 = vsub.s32 0, %v46
  %v48 = vrot.slane %v43, %v47
  %v49 = vmul.f32 %v40, %v48
  %v50 = vlaneseq
  %v51 = vshrl.u32 %v50, 7
  %v52 = vsub.s32 0, %v51
  %v53 = vrot.slane %v44, %v52
  %v54 = vmul.f32 %v42, %v53
  %v55 = vsub.f32 %v49, %v54
  %v56 = vadd.f32 %v34, %v55
  %v57 = vmul.f32 %v40, %v53
  %v58 = vmul.f32 %v42, %v48
  %v59 = vadd.f32 %v57, %v58
  %v60 = vadd.f32 %v38, %v59
  %s61 = scalar_lea.vmem %s0, 4
  %v62 = vld [vmem:[%s61] sm:$0x3]
  %s63 = scalar_lea.vmem %s1, 4
  %v64 = vld [vmem:[%s63] sm:$0x3]
  %v65 = vld [vmem:[%s2 + $0x2] sm:$0x1]
  %v66 = vld [vmem:[%s3 + $0x2] sm:$0x1]
  %v67 = vlaneseq
  %v68 = vshrl.u32 %v67, 7
  %v69 = vsub.s32 0, %v68
  %v70 = vrot.slane %v65, %v69
  %v71 = vmul.f32 %v62, %v70
  %v72 = vlaneseq
  %v73 = vshrl.u32 %v72, 7
  %v74 = vsub.s32 0, %v73
  %v75 = vrot.slane %v66, %v74
  %v76 = vmul.f32 %v64, %v75
  %v77 = vsub.f32 %v71, %v76
  %v78 = vadd.f32 %v56, %v77
  %v79 = vmul.f32 %v62, %v75
  %v80 = vmul.f32 %v64, %v70
  %v81 = vadd.f32 %v79, %v80
  %v82 = vadd.f32 %v60, %v81
  %s83 = scalar_lea.vmem %s0, 6
  %v84 = vld [vmem:[%s83] sm:$0x3]
  %s85 = scalar_lea.vmem %s1, 6
  %v86 = vld [vmem:[%s85] sm:$0x3]
  %v87 = vld [vmem:[%s2 + $0x3] sm:$0x1]
  %v88 = vld [vmem:[%s3 + $0x3] sm:$0x1]
  %v89 = vlaneseq
  %v90 = vshrl.u32 %v89, 7
  %v91 = vsub.s32 0, %v90
  %v92 = vrot.slane %v87, %v91
  %v93 = vmul.f32 %v84, %v92
  %v94 = vlaneseq
  %v95 = vshrl.u32 %v94, 7
  %v96 = vsub.s32 0, %v95
  %v97 = vrot.slane %v88, %v96
  %v98 = vmul.f32 %v86, %v97
  %v99 = vsub.f32 %v93, %v98
  %v100 = vadd.f32 %v78, %v99
  %v101 = vmul.f32 %v84, %v97
  %v102 = vmul.f32 %v86, %v92
  %v103 = vadd.f32 %v101, %v102
  %v104 = vadd.f32 %v82, %v103
  %105 = vst [vmem:[%s4] sm:$0x3] %v100
  %106 = vst [vmem:[%s5] sm:$0x3] %v104
  %v107 = vld [vmem:[%s0] sm:$0x3]
  %v108 = vld [vmem:[%s1] sm:$0x3]
  %s109 = scalar_lea.vmem %s2, 4
  %v110 = vld [vmem:[%s109] sm:$0x1]
  %s111 = scalar_lea.vmem %s3, 4
  %v112 = vld [vmem:[%s111] sm:$0x1]
  %v113 = vlaneseq
  %v114 = vshrl.u32 %v113, 7
  %v115 = vsub.s32 0, %v114
  %v116 = vrot.slane %v110, %v115
  %v117 = vmul.f32 %v107, %v116
  %v118 = vlaneseq
  %v119 = vshrl.u32 %v118, 7
  %v120 = vsub.s32 0, %v119
  %v121 = vrot.slane %v112, %v120
  %v122 = vmul.f32 %v108, %v121
  %v123 = vsub.f32 %v117, %v122
  %v124 = vadd.f32 %v123, 0.0
  %v125 = vmul.f32 %v107, %v121
  %v126 = vmul.f32 %v108, %v116
  %v127 = vadd.f32 %v125, %v126
  %v128 = vadd.f32 %v127, 0.0
  %v129 = vld [vmem:[%s39] sm:$0x3]
  %v130 = vld [vmem:[%s41] sm:$0x3]
  %v131 = vld [vmem:[%s109 + $0x1] sm:$0x1]
  %v132 = vld [vmem:[%s111 + $0x1] sm:$0x1]
  %v133 = vlaneseq
  %v134 = vshrl.u32 %v133, 7
  %v135 = vsub.s32 0, %v134
  %v136 = vrot.slane %v131, %v135
  %v137 = vmul.f32 %v129, %v136
  %v138 = vlaneseq
  %v139 = vshrl.u32 %v138, 7
  %v140 = vsub.s32 0, %v139
  %v141 = vrot.slane %v132, %v140
  %v142 = vmul.f32 %v130, %v141
  %v143 = vsub.f32 %v137, %v142
  %v144 = vadd.f32 %v124, %v143
  %v145 = vmul.f32 %v129, %v141
  %v146 = vmul.f32 %v130, %v136
  %v147 = vadd.f32 %v145, %v146
  %v148 = vadd.f32 %v128, %v147
  %v149 = vld [vmem:[%s61] sm:$0x3]
  %v150 = vld [vmem:[%s63] sm:$0x3]
  %v151 = vld [vmem:[%s109 + $0x2] sm:$0x1]
  %v152 = vld [vmem:[%s111 + $0x2] sm:$0x1]
  %v153 = vlaneseq
  %v154 = vshrl.u32 %v153, 7
  %v155 = vsub.s32 0, %v154
  %v156 = vrot.slane %v151, %v155
  %v157 = vmul.f32 %v149, %v156
  %v158 = vlaneseq
  %v159 = vshrl.u32 %v158, 7
  %v160 = vsub.s32 0, %v159
  %v161 = vrot.slane %v152, %v160
  %v162 = vmul.f32 %v150, %v161
  %v163 = vsub.f32 %v157, %v162
  %v164 = vadd.f32 %v144, %v163
  %v165 = vmul.f32 %v149, %v161
  %v166 = vmul.f32 %v150, %v156
  %v167 = vadd.f32 %v165, %v166
  %v168 = vadd.f32 %v148, %v167
  %v169 = vld [vmem:[%s83] sm:$0x3]
  %v170 = vld [vmem:[%s85] sm:$0x3]
  %v171 = vld [vmem:[%s109 + $0x3] sm:$0x1]
  %v172 = vld [vmem:[%s111 + $0x3] sm:$0x1]
  %v173 = vlaneseq
  %v174 = vshrl.u32 %v173, 7
  %v175 = vsub.s32 0, %v174
  %v176 = vrot.slane %v171, %v175
  %v177 = vmul.f32 %v169, %v176
  %v178 = vlaneseq
  %v179 = vshrl.u32 %v178, 7
  %v180 = vsub.s32 0, %v179
  %v181 = vrot.slane %v172, %v180
  %v182 = vmul.f32 %v170, %v181
  %v183 = vsub.f32 %v177, %v182
  %v184 = vadd.f32 %v164, %v183
  %v185 = vmul.f32 %v169, %v181
  %v186 = vmul.f32 %v170, %v176
  %v187 = vadd.f32 %v185, %v186
  %v188 = vadd.f32 %v168, %v187
  %s189 = scalar_lea.vmem %s4, 2
  %190 = vst [vmem:[%s189] sm:$0x3] %v184
  %s191 = scalar_lea.vmem %s5, 2
  %192 = vst [vmem:[%s191] sm:$0x3] %v188
  %v193 = vld [vmem:[%s0] sm:$0x3]
  %v194 = vld [vmem:[%s1] sm:$0x3]
  %s195 = scalar_lea.vmem %s2, 8
  %v196 = vld [vmem:[%s195] sm:$0x1]
  %s197 = scalar_lea.vmem %s3, 8
  %v198 = vld [vmem:[%s197] sm:$0x1]
  %v199 = vlaneseq
  %v200 = vshrl.u32 %v199, 7
  %v201 = vsub.s32 0, %v200
  %v202 = vrot.slane %v196, %v201
  %v203 = vmul.f32 %v193, %v202
  %v204 = vlaneseq
  %v205 = vshrl.u32 %v204, 7
  %v206 = vsub.s32 0, %v205
  %v207 = vrot.slane %v198, %v206
  %v208 = vmul.f32 %v194, %v207
  %v209 = vsub.f32 %v203, %v208
  %v210 = vadd.f32 %v209, 0.0
  %v211 = vmul.f32 %v193, %v207
  %v212 = vmul.f32 %v194, %v202
  %v213 = vadd.f32 %v211, %v212
  %v214 = vadd.f32 %v213, 0.0
  %v215 = vld [vmem:[%s39] sm:$0x3]
  %v216 = vld [vmem:[%s41] sm:$0x3]
  %v217 = vld [vmem:[%s195 + $0x1] sm:$0x1]
  %v218 = vld [vmem:[%s197 + $0x1] sm:$0x1]
  %v219 = vlaneseq
  %v220 = vshrl.u32 %v219, 7
  %v221 = vsub.s32 0, %v220
  %v222 = vrot.slane %v217, %v221
  %v223 = vmul.f32 %v215, %v222
  %v224 = vlaneseq
  %v225 = vshrl.u32 %v224, 7
  %v226 = vsub.s32 0, %v225
  %v227 = vrot.slane %v218, %v226
  %v228 = vmul.f32 %v216, %v227
  %v229 = vsub.f32 %v223, %v228
  %v230 = vadd.f32 %v210, %v229
  %v231 = vmul.f32 %v215, %v227
  %v232 = vmul.f32 %v216, %v222
  %v233 = vadd.f32 %v231, %v232
  %v234 = vadd.f32 %v214, %v233
  %v235 = vld [vmem:[%s61] sm:$0x3]
  %v236 = vld [vmem:[%s63] sm:$0x3]
  %v237 = vld [vmem:[%s195 + $0x2] sm:$0x1]
  %v238 = vld [vmem:[%s197 + $0x2] sm:$0x1]
  %v239 = vlaneseq
  %v240 = vshrl.u32 %v239, 7
  %v241 = vsub.s32 0, %v240
  %v242 = vrot.slane %v237, %v241
  %v243 = vmul.f32 %v235, %v242
  %v244 = vlaneseq
  %v245 = vshrl.u32 %v244, 7
  %v246 = vsub.s32 0, %v245
  %v247 = vrot.slane %v238, %v246
  %v248 = vmul.f32 %v236, %v247
  %v249 = vsub.f32 %v243, %v248
  %v250 = vadd.f32 %v230, %v249
  %v251 = vmul.f32 %v235, %v247
  %v252 = vmul.f32 %v236, %v242
  %v253 = vadd.f32 %v251, %v252
  %v254 = vadd.f32 %v234, %v253
  %v255 = vld [vmem:[%s83] sm:$0x3]
  %v256 = vld [vmem:[%s85] sm:$0x3]
  %v257 = vld [vmem:[%s195 + $0x3] sm:$0x1]
  %v258 = vld [vmem:[%s197 + $0x3] sm:$0x1]
  %v259 = vlaneseq
  %v260 = vshrl.u32 %v259, 7
  %v261 = vsub.s32 0, %v260
  %v262 = vrot.slane %v257, %v261
  %v263 = vmul.f32 %v255, %v262
  %v264 = vlaneseq
  %v265 = vshrl.u32 %v264, 7
  %v266 = vsub.s32 0, %v265
  %v267 = vrot.slane %v258, %v266
  %v268 = vmul.f32 %v256, %v267
  %v269 = vsub.f32 %v263, %v268
  %v270 = vadd.f32 %v250, %v269
  %v271 = vmul.f32 %v255, %v267
  %v272 = vmul.f32 %v256, %v262
  %v273 = vadd.f32 %v271, %v272
  %v274 = vadd.f32 %v254, %v273
  %s275 = scalar_lea.vmem %s4, 4
  %276 = vst [vmem:[%s275] sm:$0x3] %v270
  %s277 = scalar_lea.vmem %s5, 4
  %278 = vst [vmem:[%s277] sm:$0x3] %v274
  %v279 = vld [vmem:[%s0] sm:$0x3]
  %v280 = vld [vmem:[%s1] sm:$0x3]
  %s281 = scalar_lea.vmem %s2, 12
  %v282 = vld [vmem:[%s281] sm:$0x1]
  %s283 = scalar_lea.vmem %s3, 12
  %v284 = vld [vmem:[%s283] sm:$0x1]
  %v285 = vlaneseq
  %v286 = vshrl.u32 %v285, 7
  %v287 = vsub.s32 0, %v286
  %v288 = vrot.slane %v282, %v287
  %v289 = vmul.f32 %v279, %v288
  %v290 = vlaneseq
  %v291 = vshrl.u32 %v290, 7
  %v292 = vsub.s32 0, %v291
  %v293 = vrot.slane %v284, %v292
  %v294 = vmul.f32 %v280, %v293
  %v295 = vsub.f32 %v289, %v294
  %v296 = vadd.f32 %v295, 0.0
  %v297 = vmul.f32 %v279, %v293
  %v298 = vmul.f32 %v280, %v288
  %v299 = vadd.f32 %v297, %v298
  %v300 = vadd.f32 %v299, 0.0
  %v301 = vld [vmem:[%s39] sm:$0x3]
  %v302 = vld [vmem:[%s41] sm:$0x3]
  %v303 = vld [vmem:[%s281 + $0x1] sm:$0x1]
  %v304 = vld [vmem:[%s283 + $0x1] sm:$0x1]
  %v305 = vlaneseq
  %v306 = vshrl.u32 %v305, 7
  %v307 = vsub.s32 0, %v306
  %v308 = vrot.slane %v303, %v307
  %v309 = vmul.f32 %v301, %v308
  %v310 = vlaneseq
  %v311 = vshrl.u32 %v310, 7
  %v312 = vsub.s32 0, %v311
  %v313 = vrot.slane %v304, %v312
  %v314 = vmul.f32 %v302, %v313
  %v315 = vsub.f32 %v309, %v314
  %v316 = vadd.f32 %v296, %v315
  %v317 = vmul.f32 %v301, %v313
  %v318 = vmul.f32 %v302, %v308
  %v319 = vadd.f32 %v317, %v318
  %v320 = vadd.f32 %v300, %v319
  %v321 = vld [vmem:[%s61] sm:$0x3]
  %v322 = vld [vmem:[%s63] sm:$0x3]
  %v323 = vld [vmem:[%s281 + $0x2] sm:$0x1]
  %v324 = vld [vmem:[%s283 + $0x2] sm:$0x1]
  %v325 = vlaneseq
  %v326 = vshrl.u32 %v325, 7
  %v327 = vsub.s32 0, %v326
  %v328 = vrot.slane %v323, %v327
  %v329 = vmul.f32 %v321, %v328
  %v330 = vlaneseq
  %v331 = vshrl.u32 %v330, 7
  %v332 = vsub.s32 0, %v331
  %v333 = vrot.slane %v324, %v332
  %v334 = vmul.f32 %v322, %v333
  %v335 = vsub.f32 %v329, %v334
  %v336 = vadd.f32 %v316, %v335
  %v337 = vmul.f32 %v321, %v333
  %v338 = vmul.f32 %v322, %v328
  %v339 = vadd.f32 %v337, %v338
  %v340 = vadd.f32 %v320, %v339
  %v341 = vld [vmem:[%s83] sm:$0x3]
  %v342 = vld [vmem:[%s85] sm:$0x3]
  %v343 = vld [vmem:[%s281 + $0x3] sm:$0x1]
  %v344 = vld [vmem:[%s283 + $0x3] sm:$0x1]
  %v345 = vlaneseq
  %v346 = vshrl.u32 %v345, 7
  %v347 = vsub.s32 0, %v346
  %v348 = vrot.slane %v343, %v347
  %v349 = vmul.f32 %v341, %v348
  %v350 = vlaneseq
  %v351 = vshrl.u32 %v350, 7
  %v352 = vsub.s32 0, %v351
  %v353 = vrot.slane %v344, %v352
  %v354 = vmul.f32 %v342, %v353
  %v355 = vsub.f32 %v349, %v354
  %v356 = vadd.f32 %v336, %v355
  %v357 = vmul.f32 %v341, %v353
  %v358 = vmul.f32 %v342, %v348
  %v359 = vadd.f32 %v357, %v358
  %v360 = vadd.f32 %v340, %v359
  %s361 = scalar_lea.vmem %s4, 6
  %362 = vst [vmem:[%s361] sm:$0x3] %v356
  %s363 = scalar_lea.vmem %s5, 6
  %364 = vst [vmem:[%s363] sm:$0x3] %v360
  // Predicated region
  $region18: #{fno2d_forward.2} parent=0 // pred_check
    _
  $region19: #{fno2d_forward.2} parent=0 // pred_check_branch
    %366 = sbr.rel (0) target = $region21
  $region20: #{fno2d_forward.2} parent=0 // pred_region
    _
  $region21: #{fno2d_forward.2} parent=0 // pred_fallthru
    _
  // Predicated region
  $region22: #{fno2d_forward.2} parent=0 // pred_check
    _
  $region23: #{fno2d_forward.2} parent=0 // pred_check_branch
    %368 = sbr.rel (0) target = $region25
  $region24: #{fno2d_forward.2} parent=0 // pred_region
    _
  $region25: #{fno2d_forward.2} parent=0 // pred_fallthru
    _
  // Predicated region
  $region26: #{fno2d_forward.2} parent=0 // pred_check
    _
  $region27: #{fno2d_forward.2} parent=0 // pred_check_branch
    %370 = sbr.rel (0) target = $region29
  $region28: #{fno2d_forward.2} parent=0 // pred_region
    _
  $region29: #{fno2d_forward.2} parent=0 // pred_fallthru
    _
  // Predicated region
  $region30: #{fno2d_forward.2} parent=0 // pred_check
    _
  $region31: #{fno2d_forward.2} parent=0 // pred_check_branch
    %372 = sbr.rel (0) target = $region33
  $region32: #{fno2d_forward.2} parent=0 // pred_region
    _
  $region33: #{fno2d_forward.2} parent=0 // pred_fallthru
    _

// kernel: fno2d_forward.3
$region0: #{fno2d_forward.3}
  #allocation0 [shape = 'u32[]', space=smem, size = 0x4, offset = 0x4, fixed_abs, tag = 'smem constant byte address 0x4 - core index']
  #allocation1 [shape = 'u32[144,128]{1,0:T(1,128)}', space=vmem, size = 0x12000, scoped, tag = 'internal scratch']
  %s0 = inlined_call_operand.vmem [shape: f32[4,4], index: 0, kind: input, shape index: {}]
  %s1 = inlined_call_operand.vmem [shape: f32[4,1], index: 1, kind: input, shape index: {}]
  %s2 = inlined_call_operand.vmem [shape: f32[2,4,256], index: 2, kind: input, shape index: {}]
  %s3 = inlined_call_operand.vmem [shape: f32[2,4,256], index: 3, kind: input, shape index: {}]
  %s4 = inlined_call_operand.vmem [shape: f32[2,4,256], index: 4, kind: output, shape index: {}]
  %s5 = sld [smem:[#allocation0]]
  $region49: #{fno2d_forward.3} parent=0
    _
  %s7 = ssub.s32 1, %s5
  %s8 = scalar_select 0, %s7, %s5
  loop: start=0, step=1, limit=4
  $region2: #{fno2d_forward.3} parent=0 // loop_pre_header
    _
  $region3: #{fno2d_forward.3} parent=0 // loop_header
    %s10 = sphi 0, %s14
    %p11 = scmp.ge.s32.totalorder %s10, 4
    %s17 = sphi 0, %s29
    %s18 = sphi 0, %s25
    %s19 = sphi 0, %s17
    %s20 = sphi 0, %s18
    %s21 = sphi 0, %s19
    %s22 = sphi 0, %s20
    %s30 = sphi 0, %s30
    %s32 = sphi 0, %s30
    %s33 = sphi 0, %s32
    %s47 = sphi 0, %s33
    %s51 = sphi 0, %s51
    %s53 = sphi 0, %s51
    %s54 = sphi 0, %s53
    %s68 = sphi 0, %s54
    %s76 = sphi 0, %s78
    %s79 = sphi 0, %s76
    %s80 = sphi 0, %s79
    %s96 = sphi 0, %s80
    %s104 = sphi 0, %s106
    %s107 = sphi 0, %s104
    %s108 = sphi 0, %s107
    %s124 = sphi 0, %s108
    %s132 = sphi 0, %s134
    %s135 = sphi 0, %s132
    %s136 = sphi 0, %s135
    %s152 = sphi 0, %s136
  $region4: #{fno2d_forward.3} parent=0 // loop_header_branch
    %13 = sbr.rel (%p11) target = $region8
  $region5: #{fno2d_forward.3} parent=0 // loop_body
    %s15 = ssub.s32 %s10, 1
    %s16 = ssub.s32 %s10, 2
    %s23 = sadd.s32 1, %s18
    %p24 = scmp.ge.s32.totalorder %s23, 2
    %s25 = scalar_select %p24, 0, %s23
    %s26 = sadd.s32 1, %s17
    %s27 = scalar_select %p24, %s26, %s17
    %p28 = scmp.ge.s32.totalorder %s27, 1
    %s29 = scalar_select %p28, 0, %s27
    %s31 = sadd.s32 %s30, 1
    %p34 = scmp.eq.s32.totalorder %s10, 1
    %p35 = scmp.ne.s32.totalorder %s30, %s32
    %p36 = scmp.eq.s32.totalorder %s10, 0
    %p37 = por %p35, %p36
    %p38 = scmp.ne.s32.totalorder %s30, %s32
    %p39 = scmp.eq.s32.totalorder %s15, 1
    %p40 = por %p38, %p39
    %p41 = scmp.ne.s32.totalorder %s32, %s33
    %p42 = scmp.eq.s32.totalorder %s15, 0
    %p43 = por %p41, %p42
    %p44 = scmp.ne.s32.totalorder %s32, %s33
    %p45 = scmp.eq.s32.totalorder %s16, 1
    %p46 = por %p44, %p45
    %p48 = scmp.ne.s32.totalorder %s33, %s47
    %p49 = scmp.eq.s32.totalorder %s16, 0
    %p50 = por %p48, %p49
    %s52 = sadd.s32 %s51, 1
    %p55 = scmp.eq.s32.totalorder %s10, 1
    %p56 = scmp.ne.s32.totalorder %s51, %s53
    %p57 = scmp.eq.s32.totalorder %s10, 0
    %p58 = por %p56, %p57
    %p59 = scmp.ne.s32.totalorder %s51, %s53
    %p60 = scmp.eq.s32.totalorder %s15, 1
    %p61 = por %p59, %p60
    %p62 = scmp.ne.s32.totalorder %s53, %s54
    %p63 = scmp.eq.s32.totalorder %s15, 0
    %p64 = por %p62, %p63
    %p65 = scmp.ne.s32.totalorder %s53, %s54
    %p66 = scmp.eq.s32.totalorder %s16, 1
    %p67 = por %p65, %p66
    %p69 = scmp.ne.s32.totalorder %s54, %s68
    %p70 = scmp.eq.s32.totalorder %s16, 0
    %p71 = por %p69, %p70
    %s72 = ssub.s32 %s18, %s25
    %s73 = ssub.s32 %s17, %s29
    %s74 = sor.u32 %s72, %s73
    %p75 = scmp.eq.s32.totalorder %s74, 0
    %s77 = sadd.s32 %s76, 1
    %s78 = scalar_select %p75, %s76, %s77
    %p81 = pneg %p75
    %p82 = scmp.eq.s32.totalorder %s10, 1
    %p83 = por %p81, %p82
    %p84 = scmp.ne.s32.totalorder %s76, %s79
    %p85 = scmp.eq.s32.totalorder %s10, 0
    %p86 = por %p84, %p85
    %p87 = scmp.ne.s32.totalorder %s76, %s79
    %p88 = scmp.eq.s32.totalorder %s15, 1
    %p89 = por %p87, %p88
    %p90 = scmp.ne.s32.totalorder %s79, %s80
    %p91 = scmp.eq.s32.totalorder %s15, 0
    %p92 = por %p90, %p91
    %p93 = scmp.ne.s32.totalorder %s79, %s80
    %p94 = scmp.eq.s32.totalorder %s16, 1
    %p95 = por %p93, %p94
    %p97 = scmp.ne.s32.totalorder %s80, %s96
    %p98 = scmp.eq.s32.totalorder %s16, 0
    %p99 = por %p97, %p98
    %s100 = ssub.s32 %s18, %s25
    %s101 = ssub.s32 %s17, %s29
    %s102 = sor.u32 %s100, %s101
    %p103 = scmp.eq.s32.totalorder %s102, 0
    %s105 = sadd.s32 %s104, 1
    %s106 = scalar_select %p103, %s104, %s105
    %p109 = pneg %p103
    %p110 = scmp.eq.s32.totalorder %s10, 1
    %p111 = por %p109, %p110
    %p112 = scmp.ne.s32.totalorder %s104, %s107
    %p113 = scmp.eq.s32.totalorder %s10, 0
    %p114 = por %p112, %p113
    %p115 = scmp.ne.s32.totalorder %s104, %s107
    %p116 = scmp.eq.s32.totalorder %s15, 1
    %p117 = por %p115, %p116
    %p118 = scmp.ne.s32.totalorder %s107, %s108
    %p119 = scmp.eq.s32.totalorder %s15, 0
    %p120 = por %p118, %p119
    %p121 = scmp.ne.s32.totalorder %s107, %s108
    %p122 = scmp.eq.s32.totalorder %s16, 1
    %p123 = por %p121, %p122
    %p125 = scmp.ne.s32.totalorder %s108, %s124
    %p126 = scmp.eq.s32.totalorder %s16, 0
    %p127 = por %p125, %p126
    %s128 = ssub.s32 %s18, %s25
    %s129 = ssub.s32 %s17, %s29
    %s130 = sor.u32 %s128, %s129
    %p131 = scmp.eq.s32.totalorder %s130, 0
    %s133 = sadd.s32 %s132, 1
    %s134 = scalar_select %p131, %s132, %s133
    %p137 = pneg %p131
    %p138 = scmp.eq.s32.totalorder %s10, 1
    %p139 = por %p137, %p138
    %p140 = scmp.ne.s32.totalorder %s132, %s135
    %p141 = scmp.eq.s32.totalorder %s10, 0
    %p142 = por %p140, %p141
    %p143 = scmp.ne.s32.totalorder %s132, %s135
    %p144 = scmp.eq.s32.totalorder %s15, 1
    %p145 = por %p143, %p144
    %p146 = scmp.ne.s32.totalorder %s135, %s136
    %p147 = scmp.eq.s32.totalorder %s15, 0
    %p148 = por %p146, %p147
    %p149 = scmp.ne.s32.totalorder %s135, %s136
    %p150 = scmp.eq.s32.totalorder %s16, 1
    %p151 = por %p149, %p150
    %p153 = scmp.ne.s32.totalorder %s136, %s152
    %p154 = scmp.eq.s32.totalorder %s16, 0
    %p155 = por %p153, %p154
    %p156 = scmp.le.s32.totalorder 1, %s10
    %p157 = scmp.lt.s32.totalorder %s10, 3
    %p158 = pnand %p156, %p157
    %p159 = pneg %p158
    // Predicated region
    $region9: #{fno2d_forward.3} parent=5 // pred_check
      _
    $region10: #{fno2d_forward.3} parent=5 // pred_check_branch
      %161 = sbr.rel (%p158) target = $region12
    $region11: #{fno2d_forward.3} parent=5 // pred_region
      %s162 = ssub.s32 %s10, 1
      // Predicated region
      $region13: #{fno2d_forward.3} parent=11 // pred_check
        %p163 = pneg %p43
      $region14: #{fno2d_forward.3} parent=11 // pred_check_branch
        %165 = sbr.rel (%p163) target = $region16
      $region15: #{fno2d_forward.3} parent=11 // pred_region
        _
      $region16: #{fno2d_forward.3} parent=11 // pred_fallthru
        _
      // Predicated region
      $region17: #{fno2d_forward.3} parent=11 // pred_check
        %p166 = pneg %p64
      $region18: #{fno2d_forward.3} parent=11 // pred_check_branch
        %168 = sbr.rel (%p166) target = $region20
      $region19: #{fno2d_forward.3} parent=11 // pred_region
        _
      $region20: #{fno2d_forward.3} parent=11 // pred_fallthru
        _
    $region12: #{fno2d_forward.3} parent=5 // pred_fallthru
      _
    %p169 = scmp.lt.s32.totalorder %s10, 2
    // Predicated region
    $region21: #{fno2d_forward.3} parent=5 // pred_check
      %p170 = pneg %p169
    $region22: #{fno2d_forward.3} parent=5 // pred_check_branch
      %172 = sbr.rel (%p170) target = $region24
    $region23: #{fno2d_forward.3} parent=5 // pred_region
      // Predicated region
      $region25: #{fno2d_forward.3} parent=23 // pred_check
        %p173 = pneg %p86
      $region26: #{fno2d_forward.3} parent=23 // pred_check_branch
        %175 = sbr.rel (%p173) target = $region28
      $region27: #{fno2d_forward.3} parent=23 // pred_region
        %s176 = smul.u32 2, %s17
        %p177 = scmp.lt.s32.totalorder %s18, 1
        %s178 = scalar_select %p177, %s18, 1
        %p179 = scmp.lt.s32.totalorder %s176, 1
        %s180 = scalar_select %p179, %s176, 1
        %s181 = smul.addr %s178, 2
        %s182 = sadd.s32 %s180, %s181
        %s183 = smul.addr %s182, 4
        %s184 = scalar_lea.vmem %s2, %s183
        %s185 = smul.u32 2, %s17
      $region28: #{fno2d_forward.3} parent=23 // pred_fallthru
        _
      // Predicated region
      $region29: #{fno2d_forward.3} parent=23 // pred_check
        %p186 = pneg %p114
      $region30: #{fno2d_forward.3} parent=23 // pred_check_branch
        %188 = sbr.rel (%p186) target = $region32
      $region31: #{fno2d_forward.3} parent=23 // pred_region
        %s189 = smul.u32 2, %s17
        %p190 = scmp.lt.s32.totalorder %s18, 1
        %s191 = scalar_select %p190, %s18, 1
        %p192 = scmp.lt.s32.totalorder %s189, 1
        %s193 = scalar_select %p192, %s189, 1
        %s194 = smul.addr %s191, 2
        %s195 = sadd.s32 %s193, %s194
        %s196 = smul.addr %s195, 4
        %s197 = scalar_lea.vmem %s3, %s196
        %s198 = smul.u32 2, %s17
      $region32: #{fno2d_forward.3} parent=23 // pred_fallthru
        _
    $region24: #{fno2d_forward.3} parent=5 // pred_fallthru
      _
    %p199 = scmp.le.s32.totalorder 1, %s10
    %p200 = scmp.lt.s32.totalorder %s10, 3
    %p201 = pnand %p199, %p200
    %p202 = pneg %p201
    // Predicated region
    $region33: #{fno2d_forward.3} parent=5 // pred_check
      _
    $region34: #{fno2d_forward.3} parent=5 // pred_check_branch
      %204 = sbr.rel (%p201) target = $region36
    $region35: #{fno2d_forward.3} parent=5 // pred_region
      %s205 = ssub.s32 %s10, 1
      %p206 = pneg %p43
      %p207 = pneg %p40
      %p208 = pneg %p64
      %p209 = pneg %p61
      %s210 = smul.u32 2, %s19
      %p211 = scmp.lt.s32.totalorder %s20, 1
      %s212 = scalar_select %p211, %s20, 1
      %p213 = scmp.lt.s32.totalorder %s210, 1
      %s214 = scalar_select %p213, %s210, 1
      %s215 = smul.addr %s212, 2
      %s216 = sadd.s32 %s214, %s215
      %s217 = smul.addr %s216, 4
      %s218 = scalar_lea.vmem %s2, %s217
      %p219 = pneg %p92
      %p220 = pneg %p89
      %s221 = smul.u32 2, %s19
      %p222 = scmp.lt.s32.totalorder %s20, 1
      %s223 = scalar_select %p222, %s20, 1
      %p224 = scmp.lt.s32.totalorder %s221, 1
      %s225 = scalar_select %p224, %s221, 1
      %s226 = smul.addr %s223, 2
      %s227 = sadd.s32 %s225, %s226
      %s228 = smul.addr %s227, 4
      %s229 = scalar_lea.vmem %s3, %s228
      %p230 = pneg %p120
      %p231 = pneg %p117
      %p232 = pneg %p148
      %p233 = pneg %p145
      %s234 = smul.u32 2, %s19
      %p235 = scmp.lt.s32.totalorder %s20, 1
      %s236 = scalar_select %p235, %s20, 1
      %p237 = scmp.lt.s32.totalorder %s234, 1
      %s238 = scalar_select %p237, %s234, 1
      %s239 = smul.addr %s236, 2
      %s240 = sadd.s32 %s238, %s239
      %s241 = smul.addr %s240, 4
      %s242 = scalar_lea.vmem %s4, %s241
      %s243 = smul.u32 2, %s19
      %p244 = scmp.lt.s32.totalorder %s20, 1
      %s245 = scalar_select %p244, %s20, 1
      %p246 = scmp.lt.s32.totalorder %s243, 1
      %s247 = scalar_select %p246, %s243, 1
      %s248 = smul.addr %s245, 2
      %s249 = sadd.s32 %s247, %s248
      %s250 = smul.addr %s249, 4
      %s251 = scalar_lea.vmem %s2, %s250
      %s252 = smul.u32 2, %s19
      %s253 = smul.u32 2, %s19
      %p254 = scmp.lt.s32.totalorder %s20, 1
      %s255 = scalar_select %p254, %s20, 1
      %p256 = scmp.lt.s32.totalorder %s253, 1
      %s257 = scalar_select %p256, %s253, 1
      %s258 = smul.addr %s255, 2
      %s259 = sadd.s32 %s257, %s258
      %s260 = smul.addr %s259, 4
      %s261 = scalar_lea.vmem %s3, %s260
      %s262 = smul.u32 2, %s19
      %s263 = smul.u32 2, %s19
      %p264 = scmp.lt.s32.totalorder %s20, 1
      %s265 = scalar_select %p264, %s20, 1
      %p266 = scmp.lt.s32.totalorder %s263, 1
      %s267 = scalar_select %p266, %s263, 1
      %s268 = smul.addr %s265, 2
      %s269 = sadd.s32 %s267, %s268
      %s270 = smul.addr %s269, 4
      %s271 = scalar_lea.vmem %s4, %s270
      %s272 = smul.u32 2, %s19
      %v273 = vld [vmem:[%s0] sm:$0xf]
      %v274 = vld [vmem:[%s251] sm:$0xff]
      %v275 = vld [vmem:[%s1] sm:$0xf]
      %277 = vset.pattern.permute.xlu0 0
      %278 = vperm.xlu0 %277, %v275
      %v279 = vpop.permute.xlu0 %278
      %v282 = vcombine.high %v274, %v274
      %vm283 = vcmask 31744
      %v285 = vsel %vm283, %v273, 0
      %vm287 = vcmask 1043456
      %v288 = vsel %vm287, %v274, 0
      %v290 = vsel %vm287, %v282, 0
      %292 = vmatprep.subr.mxu0 %v290
      %293 = vmatpush1.msra.mxu0 %v288
      %294 = vmatprep.subr.mxu0 0.0
      %295 = vmatpush1.msra.mxu0 0.0
      %296 = vmatprep.subr.mxu0 0.0
      %297 = vmatpush1.msra.mxu0 0.0
      %298 = vmatprep.subr.mxu0 0.0
      %299 = vmatpush1.msra.mxu0 0.0
      %300 = vmatprep.subr.mxu0 0.0
      %301 = vmatpush1.msra.mxu0 0.0
      %302 = vmatprep.subr.mxu0 0.0
      %303 = vmatpush1.msra.mxu0 0.0
      %304 = vmatprep.subr.mxu0 0.0
      %305 = vmatpush1.msra.mxu0 0.0
      %306 = vmatprep.subr.mxu0 0.0
      %307 = vmatpush1.msra.mxu0 0.0
      %308 = vmatprep.subr.mxu0 0.0
      %309 = vmatpush1.msra.mxu0 0.0
      %310 = vmatprep.subr.mxu0 0.0
      %311 = vmatpush1.msra.mxu0 0.0
      %312 = vmatprep.subr.mxu0 0.0
      %313 = vmatpush1.msra.mxu0 0.0
      %314 = vmatprep.subr.mxu0 0.0
      %315 = vmatpush1.msra.mxu0 0.0
      %316 = vmatprep.subr.mxu0 0.0
      %317 = vmatpush1.msra.mxu0 0.0
      %318 = vmatprep.subr.mxu0 0.0
      %319 = vmatpush1.msra.mxu0 0.0
      %320 = vmatprep.subr.mxu0 0.0
      %321 = vmatpush1.msra.mxu0 0.0
      %322 = vmatprep.subr.mxu0 0.0
      %323 = vmatpush1.msra.mxu0 0.0
      %324 = vmatprep.subr.mxu0 0.0
      %325 = vmatpush1.msra.mxu0 0.0
      %326 = vmatprep.subr.mxu0 0.0
      %327 = vmatpush1.msra.mxu0 0.0
      %328 = vmatprep.subr.mxu0 0.0
      %329 = vmatpush1.msra.mxu0 0.0
      %330 = vmatprep.subr.mxu0 0.0
      %331 = vmatpush1.msra.mxu0 0.0
      %332 = vmatprep.subr.mxu0 0.0
      %333 = vmatpush1.msra.mxu0 0.0
      %334 = vmatprep.subr.mxu0 0.0
      %335 = vmatpush1.msra.mxu0 0.0
      %336 = vmatprep.subr.mxu0 0.0
      %337 = vmatpush1.msra.mxu0 0.0
      %338 = vmatprep.subr.mxu0 0.0
      %339 = vmatpush1.msra.mxu0 0.0
      %340 = vmatprep.subr.mxu0 0.0
      %341 = vmatpush1.msra.mxu0 0.0
      %342 = vmatprep.subr.mxu0 0.0
      %343 = vmatpush1.msra.mxu0 0.0
      %344 = vmatprep.subr.mxu0 0.0
      %345 = vmatpush1.msra.mxu0 0.0
      %346 = vmatprep.subr.mxu0 0.0
      %347 = vmatpush1.msra.mxu0 0.0
      %348 = vmatprep.subr.mxu0 0.0
      %349 = vmatpush1.msra.mxu0 0.0
      %350 = vmatprep.subr.mxu0 0.0
      %351 = vmatpush1.msra.mxu0 0.0
      %352 = vmatprep.subr.mxu0 0.0
      %353 = vmatpush1.msra.mxu0 0.0
      %354 = vmatprep.subr.mxu0 0.0
      %355 = vmatpush1.msra.mxu0 0.0
      %356 = vmatprep.mubr.f32.mxu0 0.0
      %357 = vmatmul.mubr.f32.gmra.mrb[0].mxu0 %v285
      %v358 = vpop.f32.mrb[0].mxu0
      %v359 = vadd.f32 %v279, %v358
      %v360 = vpop.f32.mrb[0].mxu0
      %v361 = vadd.f32 %v279, %v360
      %362 = vdwg.mxu0
      %v363 = vld [vmem:[%s261] sm:$0xff]
      %v365 = vcombine.high %v363, %v363
      %v367 = vadd.f32 %v359, %v363
      %v368 = vadd.f32 %v361, %v365
      %v371 = vcombine.low %v367, %v368
      %373 = vst [vmem:[%s271] sm:$0xff] %v371
      %s374 = smul.u32 2, %s19
      %p375 = scmp.lt.s32.totalorder %s20, 1
      %s376 = scalar_select %p375, %s20, 1
      %p377 = scmp.lt.s32.totalorder %s374, 1
      %s378 = scalar_select %p377, %s374, 1
      %s379 = smul.addr %s376, 2
      %s380 = sadd.s32 %s378, %s379
      %s381 = smul.addr %s380, 4
      %s382 = scalar_lea.vmem %s4, %s381
      // Predicated region
      $region37: #{fno2d_forward.3} parent=35 // pred_check
        %p383 = pneg %p145
      $region38: #{fno2d_forward.3} parent=35 // pred_check_branch
        %385 = sbr.rel (%p383) target = $region40
      $region39: #{fno2d_forward.3} parent=35 // pred_region
        %s386 = smul.u32 2, %s19
      $region40: #{fno2d_forward.3} parent=35 // pred_fallthru
        _
    $region36: #{fno2d_forward.3} parent=5 // pred_fallthru
      _
    %p387 = scmp.le.s32.totalorder 2, %s10
    // Predicated region
    $region41: #{fno2d_forward.3} parent=5 // pred_check
      %p388 = pneg %p387
    $region42: #{fno2d_forward.3} parent=5 // pred_check_branch
      %390 = sbr.rel (%p388) target = $region44
    $region43: #{fno2d_forward.3} parent=5 // pred_region
      %s391 = ssub.s32 %s10, 2
      // Predicated region
      $region45: #{fno2d_forward.3} parent=43 // pred_check
        %p392 = pneg %p151
      $region46: #{fno2d_forward.3} parent=43 // pred_check_branch
        %394 = sbr.rel (%p392) target = $region48
      $region47: #{fno2d_forward.3} parent=43 // pred_region
        %s395 = smul.u32 2, %s21
        %p396 = scmp.lt.s32.totalorder %s22, 1
        %s397 = scalar_select %p396, %s22, 1
        %p398 = scmp.lt.s32.totalorder %s395, 1
        %s399 = scalar_select %p398, %s395, 1
        %s400 = smul.addr %s397, 2
        %s401 = sadd.s32 %s399, %s400
        %s402 = smul.addr %s401, 4
        %s403 = scalar_lea.vmem %s4, %s402
      $region48: #{fno2d_forward.3} parent=43 // pred_fallthru
        _
    $region44: #{fno2d_forward.3} parent=5 // pred_fallthru
      _
  $region6: #{fno2d_forward.3} parent=0 // loop_footer
    %s14 = sadd.s32 1, %s10
  $region7: #{fno2d_forward.3} parent=0 // loop_footer_branch
    %9 = sbr.rel target = $region3
  $region8: #{fno2d_forward.3} parent=0 // loop_exit
    _

</llo_original>
